<compile_context>
chip_gen: v7x
topology: tpu7x:2x2x1
jax: 0.10.0
libtpu: 0.0.40
codegen_flags: <defaults>
</compile_context>

<pallas_src>
import numpy as np

import jax
import jax.numpy as jnp
from jax.experimental import pallas as pl
from jax.experimental.pallas import tpu as pltpu

K = 7     # conv kernel size
PAD = 3   # conv padding


def _sam_kernel(x_ref, t_ref, b_ref, o_ref):
    """x_ref: (bblk, C, HW) VMEM; t_ref: (2, HW, HW) bf16 VMEM; b_ref: (1,) SMEM;
    o_ref: (bblk, HW) VMEM."""
    x = x_ref[...].astype(jnp.float32)                     # (bblk, C, HW)

    # Channel reductions (torch.mean / torch.max over dim=1) on lane-dense planes.
    # TODO(synk): for large C (CBAM-style 256-2048), fuse into one lax.fori_loop
    # pass carrying (sum, max) to halve the VMEM->vreg load traffic.
    avg = jnp.mean(x, axis=1)                              # (bblk, HW) f32
    mx = jnp.max(x, axis=1)                                # (bblk, HW) f32

    # 7x7 conv (2 -> 1 channels, padding=3) as two accumulated single-pass bf16
    # MXU matmuls against the per-channel block-Toeplitz matrices (f32 accum).
    # Static Ref indexing (t_ref[0] / t_ref[1]) is free; no concatenate.
    acc = jnp.dot(avg.astype(jnp.bfloat16), t_ref[0],
                  preferred_element_type=jnp.float32)      # (bblk, HW)
    acc = acc + jnp.dot(mx.astype(jnp.bfloat16), t_ref[1],
                        preferred_element_type=jnp.float32)

    o_ref[...] = jax.nn.sigmoid(acc + b_ref[0]).astype(o_ref.dtype)


def _conv_toeplitz_np(weight, H, W):
    """(1, 2, K, K) conv weights -> (2, H*W, H*W) block-Toeplitz matrices.

    conv(plane_c)[h*W + w] = sum_p plane_c[p] * M[c, p, h*W + w], matching
    PyTorch Conv2d cross-correlation with zero padding = PAD.  Built on host
    with numpy (no XLA gathers, no (2, H, W, H, W) intermediate).
    """
    w = np.asarray(weight, dtype=np.float32)[0]            # (2, K, K)
    HW = H * W
    M = np.zeros((2, HW, HW), dtype=np.float32)
    hh, ww = np.meshgrid(np.arange(H), np.arange(W), indexing="ij")
    out_idx = (hh * W + ww).ravel()                        # output positions (h, w)
    for ki in range(K):
        for kj in range(K):
            ii = hh + ki - PAD                             # input row tapped by (ki, kj)
            jj = ww + kj - PAD
            valid = ((ii >= 0) & (ii < H) & (jj >= 0) & (jj < W)).ravel()
            in_idx = (ii * W + jj).ravel()
            for c in range(2):
                M[c, in_idx[valid], out_idx[valid]] = w[c, ki, kj]
    return M


def _vmem_budget_bytes():
    """Generation-aware VMEM budget: ~75% of per-core VMEM, capped at 100 MiB.

    v5e/v6e have 128 MiB VMEM per TensorCore, v7x has 64 MiB; fall back to the
    conservative v7x figure if the query is unavailable.
    """
    try:
        cap = int(pltpu.get_tpu_info().vmem_capacity_bytes)
    except Exception:
        cap = 64 * 1024 * 1024
    return min((cap * 3) // 4, 100 * 1024 * 1024)


def _pick_batch_block(N, avail_rows):
    """Batch rows per grid step.

    Targets: (a) sublane-aligned (multiple of 8) so the (bblk, HW) output block
    stores full 8-sublane vregs, (b) an MXU-filling M (up to 256), (c) >= 2 grid
    steps once N is large enough that both v7x TensorCores get non-trivial work
    under dimension_semantics=('parallel',), (d) fit the double-buffered
    activation/output blocks in the VMEM left over after the Toeplitz operand.
    """
    half = -(-N // 2)                          # cdiv(N, 2): aim for >= 2 grid steps
    half8 = ((half + 7) // 8) * 8              # round up -> minimal tail padding
    cap = max(8, min(256, (avail_rows // 8) * 8))
    return min(half8, cap)


def spatial_attention(x, weight, bias):
    """x: (N, C, H, W); weight: (1, 2, 7, 7); bias: (1,)  ->  (N, 1, H, W)."""
    N, C, H, W = x.shape
    HW = H * W

    # Host-built Toeplitz operand (weights are static per module instance); bf16
    # halves its VMEM/HBM footprint and enables single-pass MXU matmuls.
    toep = jnp.asarray(_conv_toeplitz_np(weight, H, W), dtype=jnp.bfloat16)  # (2, HW, HW)
    b = jnp.asarray(bias, dtype=jnp.float32).reshape(1)

    vmem_limit = _vmem_budget_bytes()
    toep_bytes = 2 * HW * HW * 2                                   # bf16, single-buffered
    per_row = 2 * C * HW * x.dtype.itemsize + 2 * HW * x.dtype.itemsize  # dbl-buffered in+out
    avail_rows = max(1, (vmem_limit - toep_bytes) // per_row)
    bblk = _pick_batch_block(N, avail_rows)
    steps = -(-N // bblk)                                          # cdiv: non-divisor N ok
    Np = steps * bblk

    x2 = x.reshape(N, C, HW)                                       # free view (NCHW contiguous)
    if Np != N:
        x2 = jnp.pad(x2, ((0, Np - N), (0, 0), (0, 0)))            # zero tail rows (discarded)

    def run(single_buffer_toeplitz):
        toep_kwargs = (dict(pipeline_mode=pl.Buffered(buffer_count=1))
                       if single_buffer_toeplitz else {})
        return pl.pallas_call(
            _sam_kernel,
            out_shape=jax.ShapeDtypeStruct((Np, HW), x.dtype),
            grid_spec=pltpu.PrefetchScalarGridSpec(
                num_scalar_prefetch=0,
                grid=(steps,),
                in_specs=[
                    pl.BlockSpec((bblk, C, HW), lambda n: (n, 0, 0)),        # activations
                    pl.BlockSpec((2, HW, HW), lambda n: (0, 0, 0),           # Toeplitz weights
                                 **toep_kwargs),
                    pl.BlockSpec(memory_space=pltpu.MemorySpace.SMEM),       # bias scalar
                ],
                out_specs=pl.BlockSpec((bblk, HW), lambda n: (n, 0)),        # lane-dense slab
            ),
            compiler_params=pltpu.CompilerParams(
                dimension_semantics=("parallel",),
                vmem_limit_bytes=vmem_limit,
            ),
        )(x2, toep, b)

    try:
        out2 = run(True)
    except Exception:
        # Fallback if this jax build rejects buffer_count=1; only costs 2x VMEM
        # on the grid-invariant Toeplitz operand.
        out2 = run(False)

    return out2[:N].reshape(N, 1, H, W)


def reference(x, weight, bias):
    avg = jnp.mean(x, axis=1, keepdims=True)
    mx = jnp.max(x, axis=1, keepdims=True)
    cat = jnp.concatenate([avg, mx], axis=1)
    conv = jax.lax.conv_general_dilated(
        cat, weight, window_strides=(1, 1),
        padding=((PAD, PAD), (PAD, PAD)),
        dimension_numbers=("NCHW", "OIHW", "NCHW"),
        precision=jax.lax.Precision.HIGHEST)
    return jax.nn.sigmoid(conv + bias.reshape(1, 1, 1, 1))


if __name__ == "__main__":
    key = jax.random.PRNGKey(0)
    kx, kw, kb = jax.random.split(key, 3)

    N, C, H, W = 2, 4, 16, 16
    x = jax.random.normal(kx, (N, C, H, W), dtype=jnp.float32)

    # Deterministic synthetic parameters for nn.Conv2d(2, 1, 7, padding=3).
    weight = jax.random.normal(kw, (1, 2, K, K), dtype=jnp.float32) * 0.1
    bias = jax.random.normal(kb, (1,), dtype=jnp.float32) * 0.1

    out = jax.block_until_ready(spatial_attention(x, weight, bias))
    ref = jax.block_until_ready(reference(x, weight, bias))

    assert out.shape == (N, 1, H, W), out.shape
    # Tolerance reflects the single-pass bf16 MXU path (~1e-3 pre-sigmoid error),
    # per the performance review's precision recommendation.
    np.testing.assert_allclose(np.asarray(out), np.asarray(ref), atol=5e-3, rtol=5e-3)

    print("KERNEL_OK")
</pallas_src>

<mosaic_0001>
module attributes {stable_mosaic.version = 11 : i64} {
  func.func @_sam_kernel(%arg0: i32, %arg1: memref<8x4x256xf32, #tpu.memory_space<vmem>>, %arg2: memref<2x256x256xbf16, #tpu.memory_space<vmem>>, %arg3: memref<1xf32, #tpu.memory_space<smem>>, %arg4: memref<8x256xf32, #tpu.memory_space<vmem>>) attributes {dimension_semantics = [#tpu.dimension_semantics<parallel>], iteration_bounds = array<i64: 1>, scalar_prefetch = 0 : i64, scratch_operands = 0 : i64, tpu.core_type = #tpu.core_type<tc>, window_params = [{transform_indices = @transform_0, window_bounds = array<i64: 8, 4, 256>}, {pipeline_mode = #tpu.pipeline_mode<synchronous>, transform_indices = @transform_1, window_bounds = array<i64: 2, 256, 256>}, {transform_indices = @transform_2, window_bounds = array<i64: 1>}, {transform_indices = @transform_3, window_bounds = array<i64: 8, 256>}]} {
    %c0 = arith.constant 0 : index
    %c0_0 = arith.constant 0 : index
    %c0_1 = arith.constant 0 : index
    %0 = vector.load %arg1[%c0, %c0_0, %c0_1] : memref<8x4x256xf32, #tpu.memory_space<vmem>>, vector<8x4x256xf32>
    %cst = arith.constant dense<0.000000e+00> : vector<8x256xf32>
    %1 = vector.multi_reduction <add>, %0, %cst [1] : vector<8x4x256xf32> to vector<8x256xf32>
    %cst_2 = arith.constant 4.000000e+00 : f32
    %2 = vector.broadcast %cst_2 : f32 to vector<8x256xf32>
    %3 = arith.divf %1, %2 : vector<8x256xf32>
    %cst_3 = arith.constant dense<0xFF800000> : vector<8x256xf32>
    %4 = vector.multi_reduction <maximumf>, %0, %cst_3 [1] : vector<8x4x256xf32> to vector<8x256xf32>
    %5 = arith.truncf %3 : vector<8x256xf32> to vector<8x256xbf16>
    %c0_4 = arith.constant 0 : index
    %c0_5 = arith.constant 0 : index
    %c0_6 = arith.constant 0 : index
    %6 = vector.load %arg2[%c0_4, %c0_5, %c0_6] : memref<2x256x256xbf16, #tpu.memory_space<vmem>>, vector<1x256x256xbf16>
    %7 = vector.shape_cast %6 : vector<1x256x256xbf16> to vector<256x256xbf16>
    %cst_7 = arith.constant dense<0.000000e+00> : vector<8x256xf32>
    %8 = tpu.matmul %5, %7, %cst_7 {dimension_numbers = #tpu.dot_dimension_numbers<[1], [0], [0], [1], [0, 0, 1, 1], [], []>} : vector<8x256xbf16>, vector<256x256xbf16>, vector<8x256xf32> -> vector<8x256xf32>
    %9 = arith.truncf %4 : vector<8x256xf32> to vector<8x256xbf16>
    %c1 = arith.constant 1 : index
    %c0_8 = arith.constant 0 : index
    %c0_9 = arith.constant 0 : index
    %10 = vector.load %arg2[%c1, %c0_8, %c0_9] : memref<2x256x256xbf16, #tpu.memory_space<vmem>>, vector<1x256x256xbf16>
    %11 = vector.shape_cast %10 : vector<1x256x256xbf16> to vector<256x256xbf16>
    %cst_10 = arith.constant dense<0.000000e+00> : vector<8x256xf32>
    %12 = tpu.matmul %9, %11, %cst_10 {dimension_numbers = #tpu.dot_dimension_numbers<[1], [0], [0], [1], [0, 0, 1, 1], [], []>} : vector<8x256xbf16>, vector<256x256xbf16>, vector<8x256xf32> -> vector<8x256xf32>
    %13 = arith.addf %8, %12 : vector<8x256xf32>
    %c0_11 = arith.constant 0 : index
    %14 = memref.load %arg3[%c0_11] : memref<1xf32, #tpu.memory_space<smem>>
    %15 = vector.broadcast %14 : f32 to vector<8x256xf32>
    %16 = arith.addf %13, %15 : vector<8x256xf32>
    %17 = arith.negf %16 : vector<8x256xf32>
    %18 = math.exp %17 : vector<8x256xf32>
    %cst_12 = arith.constant 1.000000e+00 : f32
    %19 = vector.broadcast %cst_12 : f32 to vector<8x256xf32>
    %20 = arith.addf %19, %18 : vector<8x256xf32>
    %21 = arith.divf %19, %20 : vector<8x256xf32>
    %c0_13 = arith.constant 0 : index
    %c0_14 = arith.constant 0 : index
    %22 = vector.load %arg4[%c0_13, %c0_14] : memref<8x256xf32, #tpu.memory_space<vmem>>, vector<8x256xf32>
    tpu.vector_store %arg4[%c0_13, %c0_14], %21 {strides = array<i32>} : memref<8x256xf32, #tpu.memory_space<vmem>>, vector<8x256xf32>,
    return
  }
  func.func @transform_0(%arg0: i32) -> (i32, i32, i32) {
    %c0_i32 = arith.constant 0 : i32
    %c0_i32_0 = arith.constant 0 : i32
    %c0_i32_1 = arith.constant 0 : i32
    return %arg0, %c0_i32, %c0_i32_0 : i32, i32, i32
  }
  func.func @transform_1(%arg0: i32) -> (i32, i32, i32) {
    %c0_i32 = arith.constant 0 : i32
    %c0_i32_0 = arith.constant 0 : i32
    %c0_i32_1 = arith.constant 0 : i32
    %c0_i32_2 = arith.constant 0 : i32
    return %c0_i32, %c0_i32_0, %c0_i32_1 : i32, i32, i32
  }
  func.func @transform_2(%arg0: i32) -> i32 {
    %c0_i32 = arith.constant 0 : i32
    %c0_i32_0 = arith.constant 0 : i32
    return %c0_i32 : i32
  }
  func.func @transform_3(%arg0: i32) -> (i32, i32) {
    %c0_i32 = arith.constant 0 : i32
    %c0_i32_0 = arith.constant 0 : i32
    return %arg0, %c0_i32 : i32, i32
  }
}

module attributes {stable_mosaic.version = 11 : i64} {
  func.func @_sam_kernel(%arg0: i32, %arg1: memref<8x4x256xf32, #tpu.memory_space<vmem>>, %arg2: memref<2x256x256xbf16, #tpu.memory_space<vmem>>, %arg3: memref<1xf32, #tpu.memory_space<smem>>, %arg4: memref<8x256xf32, #tpu.memory_space<vmem>>) attributes {dimension_semantics = [#tpu.dimension_semantics<parallel>], iteration_bounds = array<i64: 1>, scalar_prefetch = 0 : i64, scratch_operands = 0 : i64, tpu.core_type = #tpu.core_type<tc>, window_params = [{transform_indices = @transform_0, window_bounds = array<i64: 8, 4, 256>}, {pipeline_mode = #tpu.pipeline_mode<synchronous>, transform_indices = @transform_1, window_bounds = array<i64: 2, 256, 256>}, {transform_indices = @transform_2, window_bounds = array<i64: 1>}, {transform_indices = @transform_3, window_bounds = array<i64: 8, 256>}]} {
    %c0 = arith.constant 0 : index
    %c0_0 = arith.constant 0 : index
    %c0_1 = arith.constant 0 : index
    %0 = vector.load %arg1[%c0, %c0_0, %c0_1] : memref<8x4x256xf32, #tpu.memory_space<vmem>>, vector<8x4x256xf32>
    %cst = arith.constant dense<0.000000e+00> : vector<8x256xf32>
    %1 = vector.multi_reduction <add>, %0, %cst [1] : vector<8x4x256xf32> to vector<8x256xf32>
    %cst_2 = arith.constant 4.000000e+00 : f32
    %2 = vector.broadcast %cst_2 : f32 to vector<8x256xf32>
    %3 = arith.divf %1, %2 : vector<8x256xf32>
    %cst_3 = arith.constant dense<0xFF800000> : vector<8x256xf32>
    %4 = vector.multi_reduction <maximumf>, %0, %cst_3 [1] : vector<8x4x256xf32> to vector<8x256xf32>
    %5 = arith.truncf %3 : vector<8x256xf32> to vector<8x256xbf16>
    %c0_4 = arith.constant 0 : index
    %c0_5 = arith.constant 0 : index
    %c0_6 = arith.constant 0 : index
    %6 = vector.load %arg2[%c0_4, %c0_5, %c0_6] : memref<2x256x256xbf16, #tpu.memory_space<vmem>>, vector<1x256x256xbf16>
    %7 = vector.shape_cast %6 : vector<1x256x256xbf16> to vector<256x256xbf16>
    %cst_7 = arith.constant dense<0.000000e+00> : vector<8x256xf32>
    %8 = tpu.matmul %5, %7, %cst_7 {dimension_numbers = #tpu.dot_dimension_numbers<[1], [0], [0], [1], [0, 0, 1, 1], [], []>} : vector<8x256xbf16>, vector<256x256xbf16>, vector<8x256xf32> -> vector<8x256xf32>
    %9 = arith.truncf %4 : vector<8x256xf32> to vector<8x256xbf16>
    %c1 = arith.constant 1 : index
    %c0_8 = arith.constant 0 : index
    %c0_9 = arith.constant 0 : index
    %10 = vector.load %arg2[%c1, %c0_8, %c0_9] : memref<2x256x256xbf16, #tpu.memory_space<vmem>>, vector<1x256x256xbf16>
    %11 = vector.shape_cast %10 : vector<1x256x256xbf16> to vector<256x256xbf16>
    %cst_10 = arith.constant dense<0.000000e+00> : vector<8x256xf32>
    %12 = tpu.matmul %9, %11, %cst_10 {dimension_numbers = #tpu.dot_dimension_numbers<[1], [0], [0], [1], [0, 0, 1, 1], [], []>} : vector<8x256xbf16>, vector<256x256xbf16>, vector<8x256xf32> -> vector<8x256xf32>
    %13 = arith.addf %8, %12 : vector<8x256xf32>
    %c0_11 = arith.constant 0 : index
    %14 = memref.load %arg3[%c0_11] : memref<1xf32, #tpu.memory_space<smem>>
    %15 = vector.broadcast %14 : f32 to vector<8x256xf32>
    %16 = arith.addf %13, %15 : vector<8x256xf32>
    %17 = arith.negf %16 : vector<8x256xf32>
    %18 = math.exp %17 : vector<8x256xf32>
    %cst_12 = arith.constant 1.000000e+00 : f32
    %19 = vector.broadcast %cst_12 : f32 to vector<8x256xf32>
    %20 = arith.addf %19, %18 : vector<8x256xf32>
    %21 = arith.divf %19, %20 : vector<8x256xf32>
    %c0_13 = arith.constant 0 : index
    %c0_14 = arith.constant 0 : index
    %22 = vector.load %arg4[%c0_13, %c0_14] : memref<8x256xf32, #tpu.memory_space<vmem>>, vector<8x256xf32>
    tpu.vector_store %arg4[%c0_13, %c0_14], %21 {strides = array<i32>} : memref<8x256xf32, #tpu.memory_space<vmem>>, vector<8x256xf32>,
    return
  }
  func.func @transform_0(%arg0: i32) -> (i32, i32, i32) {
    %c0_i32 = arith.constant 0 : i32
    %c0_i32_0 = arith.constant 0 : i32
    %c0_i32_1 = arith.constant 0 : i32
    return %arg0, %c0_i32, %c0_i32_0 : i32, i32, i32
  }
  func.func @transform_1(%arg0: i32) -> (i32, i32, i32) {
    %c0_i32 = arith.constant 0 : i32
    %c0_i32_0 = arith.constant 0 : i32
    %c0_i32_1 = arith.constant 0 : i32
    %c0_i32_2 = arith.constant 0 : i32
    return %c0_i32, %c0_i32_0, %c0_i32_1 : i32, i32, i32
  }
  func.func @transform_2(%arg0: i32) -> i32 {
    %c0_i32 = arith.constant 0 : i32
    %c0_i32_0 = arith.constant 0 : i32
    return %c0_i32 : i32
  }
  func.func @transform_3(%arg0: i32) -> (i32, i32) {
    %c0_i32 = arith.constant 0 : i32
    %c0_i32_0 = arith.constant 0 : i32
    return %arg0, %c0_i32 : i32, i32
  }
}

</mosaic_0001>

<llo_original>
// kernel: tpu_custom_call.1
$region0: #{tpu_custom_call.1}
  #allocation0 [shape = 'u32[]', space=smem, size = 0x4, offset = 0x4, fixed_abs, tag = 'smem constant byte address 0x4 - core index']
  #allocation1 [shape = 'u32[144,128]{1,0:T(1,128)}', space=vmem, size = 0x12000, scoped, tag = 'internal scratch']
  #allocation2 [shape = 'f32[1]{0:T(128)S(6)}', space=smem, size = 0x200, scoped, tag = 'scoped memory for tpu_custom_call.1']
  %s0 = inlined_call_operand.hbm [shape: f32[8,4,256], index: 0, kind: input, shape index: {}]
  %s1 = inlined_call_operand.hbm [shape: bf16[2,256,256], index: 1, kind: input, shape index: {}]
  %s2 = inlined_call_operand.<no memory space> [shape: f32[1], index: 2, kind: input, shape index: {}]
  %s3 = inlined_call_operand.hbm [shape: f32[8,256], index: 3, kind: output, shape index: {}]
  %s4 = sld [smem:[#allocation0]]
  $region30: #{tpu_custom_call.1} parent=0
    _
  %s6 = ssub.s32 1, %s4
  %s7 = scalar_select 0, %s6, %s4
  %8 = sst [smem:[#allocation2]] %s2
  $region1: #{tpu_custom_call.1} parent=0
    #allocation3 [shape = 'u8[32768]{0}', space=vmem, size = 0x8000, scoped, tag = 'input window, operand 0, single buffered']
    #allocation4 [shape = 's32[1]{0}', space=sflag, size = 0x4, scoped, tag = 'scoped memory for tpu_custom_call.1']
    #allocation5 [shape = 's32[1]{0}', space=sflag, size = 0x4, scoped, tag = 'scoped memory for tpu_custom_call.1']
    #allocation6 [shape = 'u8[262144]{0}', space=vmem, size = 0x40000, scoped, tag = 'input window, operand 1, single buffered']
    #allocation7 [shape = 's32[1]{0}', space=sflag, size = 0x4, scoped, tag = 'scoped memory for tpu_custom_call.1']
    #allocation8 [shape = 'u8[8192]{0}', space=vmem, size = 0x2000, scoped, tag = 'output window, operand 0, single buffered']
    %9 = vsyncpa [#allocation4], 0
    %10 = vsyncpa [#allocation7], 0
    %11 = vsyncpa [#allocation5], 0
    // Predicated region
    $region2: #{tpu_custom_call.1} parent=1 // pred_check
      _
    $region3: #{tpu_custom_call.1} parent=1 // pred_check_branch
      %13 = sbr.rel (0) target = $region5
    $region4: #{tpu_custom_call.1} parent=1 // pred_region
      %s15 = ssub.s32 1024, 1024
      %16 = vsyncadd [#allocation4], %s15
      %s17 = sshll.u32 [#allocation3], 4
      %s18 = int_to_ptr.vmem [resolvable:$true] %s17
      %23 = dma.hbm_to_vmem [thread:$0]  %s0, 1024, %s18, [#allocation4], 128, 128, 8
    $region5: #{tpu_custom_call.1} parent=1 // pred_fallthru
      _
    // Predicated region
    $region6: #{tpu_custom_call.1} parent=1 // pred_check
      _
    $region7: #{tpu_custom_call.1} parent=1 // pred_check_branch
      %25 = sbr.rel (0) target = $region9
    $region8: #{tpu_custom_call.1} parent=1 // pred_region
      %s27 = ssub.s32 8192, 8192
      %28 = vsyncadd [#allocation7], %s27
      %s29 = sshll.u32 [#allocation6], 4
      %s30 = int_to_ptr.vmem [resolvable:$true] %s29
      %35 = dma.hbm_to_vmem [thread:$0]  %s1, 8192, %s30, [#allocation7], 128, 128, 8
    $region9: #{tpu_custom_call.1} parent=1 // pred_fallthru
      _
    // Predicated region
    $region10: #{tpu_custom_call.1} parent=1 // pred_check
      _
    $region11: #{tpu_custom_call.1} parent=1 // pred_check_branch
      %37 = sbr.rel (0) target = $region13
    $region12: #{tpu_custom_call.1} parent=1 // pred_region
      _
    $region13: #{tpu_custom_call.1} parent=1 // pred_fallthru
      _
    // Predicated region
    $region14: #{tpu_custom_call.1} parent=1 // pred_check
      _
    $region15: #{tpu_custom_call.1} parent=1 // pred_check_branch
      %39 = sbr.rel (0) target = $region17
    $region16: #{tpu_custom_call.1} parent=1 // pred_region
      %40 = dma.done [#allocation4], 1024
    $region17: #{tpu_custom_call.1} parent=1 // pred_fallthru
      _
    // Predicated region
    $region18: #{tpu_custom_call.1} parent=1 // pred_check
      _
    $region19: #{tpu_custom_call.1} parent=1 // pred_check_branch
      %42 = sbr.rel (0) target = $region21
    $region20: #{tpu_custom_call.1} parent=1 // pred_region
      %43 = dma.done [#allocation7], 8192
    $region21: #{tpu_custom_call.1} parent=1 // pred_fallthru
      _
    %v44 = vld [vmem:[#allocation3] sm:$0xff]
    %v45 = vld [vmem:[#allocation3 + $0x8] sm:$0xff]
    %v46 = vld [vmem:[#allocation3 + $0x10] sm:$0xff]
    %v47 = vld [vmem:[#allocation3 + $0x18] sm:$0xff]
    %v48 = vld [vmem:[#allocation3 + $0x20] sm:$0xff]
    %v49 = vld [vmem:[#allocation3 + $0x28] sm:$0xff]
    %v50 = vld [vmem:[#allocation3 + $0x30] sm:$0xff]
    %v51 = vld [vmem:[#allocation3 + $0x38] sm:$0xff]
    %v60 = vcombine.high %v44, %v44
    %v61 = vcombine.high %v45, %v45
    %v62 = vcombine.high %v46, %v46
    %v63 = vcombine.high %v47, %v47
    %v64 = vcombine.high %v48, %v48
    %v65 = vcombine.high %v49, %v49
    %v66 = vcombine.high %v50, %v50
    %v67 = vcombine.high %v51, %v51
    %vm76 = vcmask 1043456
    %v77 = vsel %vm76, %v44, 0.0
    %v78 = vrot.slane %v77, 4
    %v79 = vadd.f32 %v77, %v78
    %v80 = vrot.slane %v79, 2
    %v81 = vadd.f32 %v79, %v80
    %v82 = vrot.slane %v81, 1
    %v83 = vadd.f32 %v81, %v82
    %v84 = vsel %vm76, %v60, 0.0
    %v85 = vrot.slane %v84, 4
    %v86 = vadd.f32 %v84, %v85
    %v87 = vrot.slane %v86, 2
    %v88 = vadd.f32 %v86, %v87
    %v89 = vrot.slane %v88, 1
    %v90 = vadd.f32 %v88, %v89
    %v91 = vsel %vm76, %v45, 0.0
    %v92 = vrot.slane %v91, 4
    %v93 = vadd.f32 %v91, %v92
    %v94 = vrot.slane %v93, 2
    %v95 = vadd.f32 %v93, %v94
    %v96 = vrot.slane %v95, 1
    %v97 = vadd.f32 %v95, %v96
    %v98 = vsel %vm76, %v61, 0.0
    %v99 = vrot.slane %v98, 4
    %v100 = vadd.f32 %v98, %v99
    %v101 = vrot.slane %v100, 2
    %v102 = vadd.f32 %v100, %v101
    %v103 = vrot.slane %v102, 1
    %v104 = vadd.f32 %v102, %v103
    %v105 = vsel %vm76, %v46, 0.0
    %v106 = vrot.slane %v105, 4
    %v107 = vadd.f32 %v105, %v106
    %v108 = vrot.slane %v107, 2
    %v109 = vadd.f32 %v107, %v108
    %v110 = vrot.slane %v109, 1
    %v111 = vadd.f32 %v109, %v110
    %v112 = vsel %vm76, %v62, 0.0
    %v113 = vrot.slane %v112, 4
    %v114 = vadd.f32 %v112, %v113
    %v115 = vrot.slane %v114, 2
    %v116 = vadd.f32 %v114, %v115
    %v117 = vrot.slane %v116, 1
    %v118 = vadd.f32 %v116, %v117
    %v119 = vsel %vm76, %v47, 0.0
    %v120 = vrot.slane %v119, 4
    %v121 = vadd.f32 %v119, %v120
    %v122 = vrot.slane %v121, 2
    %v123 = vadd.f32 %v121, %v122
    %v124 = vrot.slane %v123, 1
    %v125 = vadd.f32 %v123, %v124
    %v126 = vsel %vm76, %v63, 0.0
    %v127 = vrot.slane %v126, 4
    %v128 = vadd.f32 %v126, %v127
    %v129 = vrot.slane %v128, 2
    %v130 = vadd.f32 %v128, %v129
    %v131 = vrot.slane %v130, 1
    %v132 = vadd.f32 %v130, %v131
    %v133 = vsel %vm76, %v48, 0.0
    %v134 = vrot.slane %v133, 4
    %v135 = vadd.f32 %v133, %v134
    %v136 = vrot.slane %v135, 2
    %v137 = vadd.f32 %v135, %v136
    %v138 = vrot.slane %v137, 1
    %v139 = vadd.f32 %v137, %v138
    %v140 = vsel %vm76, %v64, 0.0
    %v141 = vrot.slane %v140, 4
    %v142 = vadd.f32 %v140, %v141
    %v143 = vrot.slane %v142, 2
    %v144 = vadd.f32 %v142, %v143
    %v145 = vrot.slane %v144, 1
    %v146 = vadd.f32 %v144, %v145
    %v147 = vsel %vm76, %v49, 0.0
    %v148 = vrot.slane %v147, 4
    %v149 = vadd.f32 %v147, %v148
    %v150 = vrot.slane %v149, 2
    %v151 = vadd.f32 %v149, %v150
    %v152 = vrot.slane %v151, 1
    %v153 = vadd.f32 %v151, %v152
    %v154 = vsel %vm76, %v65, 0.0
    %v155 = vrot.slane %v154, 4
    %v156 = vadd.f32 %v154, %v155
    %v157 = vrot.slane %v156, 2
    %v158 = vadd.f32 %v156, %v157
    %v159 = vrot.slane %v158, 1
    %v160 = vadd.f32 %v158, %v159
    %v161 = vsel %vm76, %v50, 0.0
    %v162 = vrot.slane %v161, 4
    %v163 = vadd.f32 %v161, %v162
    %v164 = vrot.slane %v163, 2
    %v165 = vadd.f32 %v163, %v164
    %v166 = vrot.slane %v165, 1
    %v167 = vadd.f32 %v165, %v166
    %v168 = vsel %vm76, %v66, 0.0
    %v169 = vrot.slane %v168, 4
    %v170 = vadd.f32 %v168, %v169
    %v171 = vrot.slane %v170, 2
    %v172 = vadd.f32 %v170, %v171
    %v173 = vrot.slane %v172, 1
    %v174 = vadd.f32 %v172, %v173
    %v175 = vsel %vm76, %v51, 0.0
    %v176 = vrot.slane %v175, 4
    %v177 = vadd.f32 %v175, %v176
    %v178 = vrot.slane %v177, 2
    %v179 = vadd.f32 %v177, %v178
    %v180 = vrot.slane %v179, 1
    %v181 = vadd.f32 %v179, %v180
    %v182 = vsel %vm76, %v67, 0.0
    %v183 = vrot.slane %v182, 4
    %v184 = vadd.f32 %v182, %v183
    %v185 = vrot.slane %v184, 2
    %v186 = vadd.f32 %v184, %v185
    %v187 = vrot.slane %v186, 1
    %v188 = vadd.f32 %v186, %v187
    %v189 = vrcp.pop 4.0
    %v190 = vmul.f32 %v83, %v189
    %v191 = vmul.f32 %v90, %v189
    %v192 = vmul.f32 %v97, %v189
    %v193 = vmul.f32 %v104, %v189
    %v194 = vmul.f32 %v111, %v189
    %v195 = vmul.f32 %v118, %v189
    %v196 = vmul.f32 %v125, %v189
    %v197 = vmul.f32 %v132, %v189
    %v198 = vmul.f32 %v139, %v189
    %v199 = vmul.f32 %v146, %v189
    %v200 = vmul.f32 %v153, %v189
    %v201 = vmul.f32 %v160, %v189
    %v202 = vmul.f32 %v167, %v189
    %v203 = vmul.f32 %v174, %v189
    %v204 = vmul.f32 %v181, %v189
    %v205 = vmul.f32 %v188, %v189
    %v206 = vsel %vm76, %v44, -inf
    %v207 = vrot.slane %v206, 4
    %v208 = vmax.f32 %v206, %v207
    %v209 = vrot.slane %v208, 2
    %v210 = vmax.f32 %v208, %v209
    %v211 = vrot.slane %v210, 1
    %v212 = vmax.f32 %v210, %v211
    %v213 = vsel %vm76, %v60, -inf
    %v214 = vrot.slane %v213, 4
    %v215 = vmax.f32 %v213, %v214
    %v216 = vrot.slane %v215, 2
    %v217 = vmax.f32 %v215, %v216
    %v218 = vrot.slane %v217, 1
    %v219 = vmax.f32 %v217, %v218
    %v220 = vsel %vm76, %v45, -inf
    %v221 = vrot.slane %v220, 4
    %v222 = vmax.f32 %v220, %v221
    %v223 = vrot.slane %v222, 2
    %v224 = vmax.f32 %v222, %v223
    %v225 = vrot.slane %v224, 1
    %v226 = vmax.f32 %v224, %v225
    %v227 = vsel %vm76, %v61, -inf
    %v228 = vrot.slane %v227, 4
    %v229 = vmax.f32 %v227, %v228
    %v230 = vrot.slane %v229, 2
    %v231 = vmax.f32 %v229, %v230
    %v232 = vrot.slane %v231, 1
    %v233 = vmax.f32 %v231, %v232
    %v234 = vsel %vm76, %v46, -inf
    %v235 = vrot.slane %v234, 4
    %v236 = vmax.f32 %v234, %v235
    %v237 = vrot.slane %v236, 2
    %v238 = vmax.f32 %v236, %v237
    %v239 = vrot.slane %v238, 1
    %v240 = vmax.f32 %v238, %v239
    %v241 = vsel %vm76, %v62, -inf
    %v242 = vrot.slane %v241, 4
    %v243 = vmax.f32 %v241, %v242
    %v244 = vrot.slane %v243, 2
    %v245 = vmax.f32 %v243, %v244
    %v246 = vrot.slane %v245, 1
    %v247 = vmax.f32 %v245, %v246
    %v248 = vsel %vm76, %v47, -inf
    %v249 = vrot.slane %v248, 4
    %v250 = vmax.f32 %v248, %v249
    %v251 = vrot.slane %v250, 2
    %v252 = vmax.f32 %v250, %v251
    %v253 = vrot.slane %v252, 1
    %v254 = vmax.f32 %v252, %v253
    %v255 = vsel %vm76, %v63, -inf
    %v256 = vrot.slane %v255, 4
    %v257 = vmax.f32 %v255, %v256
    %v258 = vrot.slane %v257, 2
    %v259 = vmax.f32 %v257, %v258
    %v260 = vrot.slane %v259, 1
    %v261 = vmax.f32 %v259, %v260
    %v262 = vsel %vm76, %v48, -inf
    %v263 = vrot.slane %v262, 4
    %v264 = vmax.f32 %v262, %v263
    %v265 = vrot.slane %v264, 2
    %v266 = vmax.f32 %v264, %v265
    %v267 = vrot.slane %v266, 1
    %v268 = vmax.f32 %v266, %v267
    %v269 = vsel %vm76, %v64, -inf
    %v270 = vrot.slane %v269, 4
    %v271 = vmax.f32 %v269, %v270
    %v272 = vrot.slane %v271, 2
    %v273 = vmax.f32 %v271, %v272
    %v274 = vrot.slane %v273, 1
    %v275 = vmax.f32 %v273, %v274
    %v276 = vsel %vm76, %v49, -inf
    %v277 = vrot.slane %v276, 4
    %v278 = vmax.f32 %v276, %v277
    %v279 = vrot.slane %v278, 2
    %v280 = vmax.f32 %v278, %v279
    %v281 = vrot.slane %v280, 1
    %v282 = vmax.f32 %v280, %v281
    %v283 = vsel %vm76, %v65, -inf
    %v284 = vrot.slane %v283, 4
    %v285 = vmax.f32 %v283, %v284
    %v286 = vrot.slane %v285, 2
    %v287 = vmax.f32 %v285, %v286
    %v288 = vrot.slane %v287, 1
    %v289 = vmax.f32 %v287, %v288
    %v290 = vsel %vm76, %v50, -inf
    %v291 = vrot.slane %v290, 4
    %v292 = vmax.f32 %v290, %v291
    %v293 = vrot.slane %v292, 2
    %v294 = vmax.f32 %v292, %v293
    %v295 = vrot.slane %v294, 1
    %v296 = vmax.f32 %v294, %v295
    %v297 = vsel %vm76, %v66, -inf
    %v298 = vrot.slane %v297, 4
    %v299 = vmax.f32 %v297, %v298
    %v300 = vrot.slane %v299, 2
    %v301 = vmax.f32 %v299, %v300
    %v302 = vrot.slane %v301, 1
    %v303 = vmax.f32 %v301, %v302
    %v304 = vsel %vm76, %v51, -inf
    %v305 = vrot.slane %v304, 4
    %v306 = vmax.f32 %v304, %v305
    %v307 = vrot.slane %v306, 2
    %v308 = vmax.f32 %v306, %v307
    %v309 = vrot.slane %v308, 1
    %v310 = vmax.f32 %v308, %v309
    %v311 = vsel %vm76, %v67, -inf
    %v312 = vrot.slane %v311, 4
    %v313 = vmax.f32 %v311, %v312
    %v314 = vrot.slane %v313, 2
    %v315 = vmax.f32 %v313, %v314
    %v316 = vrot.slane %v315, 1
    %v317 = vmax.f32 %v315, %v316
    %v318 = vpack.c.bf16 %v190, %v190
    %v319 = vpack.c.bf16 %v191, %v191
    %v320 = vpack.c.bf16 %v192, %v192
    %v321 = vpack.c.bf16 %v193, %v193
    %v322 = vpack.c.bf16 %v194, %v194
    %v323 = vpack.c.bf16 %v195, %v195
    %v324 = vpack.c.bf16 %v196, %v196
    %v325 = vpack.c.bf16 %v197, %v197
    %v326 = vpack.c.bf16 %v198, %v198
    %v327 = vpack.c.bf16 %v199, %v199
    %v328 = vpack.c.bf16 %v200, %v200
    %v329 = vpack.c.bf16 %v201, %v201
    %v330 = vpack.c.bf16 %v202, %v202
    %v331 = vpack.c.bf16 %v203, %v203
    %v332 = vpack.c.bf16 %v204, %v204
    %v333 = vpack.c.bf16 %v205, %v205
    %v334 = vld [vmem:[#allocation6] sm:$0xff]
    %v335 = vld [vmem:[#allocation6 + $0x8] sm:$0xff]
    %v336 = vld [vmem:[#allocation6 + $0x10] sm:$0xff]
    %v337 = vld [vmem:[#allocation6 + $0x18] sm:$0xff]
    %v338 = vld [vmem:[#allocation6 + $0x20] sm:$0xff]
    %v339 = vld [vmem:[#allocation6 + $0x28] sm:$0xff]
    %v340 = vld [vmem:[#allocation6 + $0x30] sm:$0xff]
    %v341 = vld [vmem:[#allocation6 + $0x38] sm:$0xff]
    %v342 = vld [vmem:[#allocation6 + $0x40] sm:$0xff]
    %v343 = vld [vmem:[#allocation6 + $0x48] sm:$0xff]
    %v344 = vld [vmem:[#allocation6 + $0x50] sm:$0xff]
    %v345 = vld [vmem:[#allocation6 + $0x58] sm:$0xff]
    %v346 = vld [vmem:[#allocation6 + $0x60] sm:$0xff]
    %v347 = vld [vmem:[#allocation6 + $0x68] sm:$0xff]
    %v348 = vld [vmem:[#allocation6 + $0x70] sm:$0xff]
    %v349 = vld [vmem:[#allocation6 + $0x78] sm:$0xff]
    %v350 = vld [vmem:[#allocation6 + $0x80] sm:$0xff]
    %v351 = vld [vmem:[#allocation6 + $0x88] sm:$0xff]
    %v352 = vld [vmem:[#allocation6 + $0x90] sm:$0xff]
    %v353 = vld [vmem:[#allocation6 + $0x98] sm:$0xff]
    %v354 = vld [vmem:[#allocation6 + $0xa0] sm:$0xff]
    %v355 = vld [vmem:[#allocation6 + $0xa8] sm:$0xff]
    %v356 = vld [vmem:[#allocation6 + $0xb0] sm:$0xff]
    %v357 = vld [vmem:[#allocation6 + $0xb8] sm:$0xff]
    %v358 = vld [vmem:[#allocation6 + $0xc0] sm:$0xff]
    %v359 = vld [vmem:[#allocation6 + $0xc8] sm:$0xff]
    %v360 = vld [vmem:[#allocation6 + $0xd0] sm:$0xff]
    %v361 = vld [vmem:[#allocation6 + $0xd8] sm:$0xff]
    %v362 = vld [vmem:[#allocation6 + $0xe0] sm:$0xff]
    %v363 = vld [vmem:[#allocation6 + $0xe8] sm:$0xff]
    %v364 = vld [vmem:[#allocation6 + $0xf0] sm:$0xff]
    %v365 = vld [vmem:[#allocation6 + $0xf8] sm:$0xff]
    %v366 = vpack.c.bf16 %v212, %v212
    %v367 = vpack.c.bf16 %v219, %v219
    %v368 = vpack.c.bf16 %v226, %v226
    %v369 = vpack.c.bf16 %v233, %v233
    %v370 = vpack.c.bf16 %v240, %v240
    %v371 = vpack.c.bf16 %v247, %v247
    %v372 = vpack.c.bf16 %v254, %v254
    %v373 = vpack.c.bf16 %v261, %v261
    %v374 = vpack.c.bf16 %v268, %v268
    %v375 = vpack.c.bf16 %v275, %v275
    %v376 = vpack.c.bf16 %v282, %v282
    %v377 = vpack.c.bf16 %v289, %v289
    %v378 = vpack.c.bf16 %v296, %v296
    %v379 = vpack.c.bf16 %v303, %v303
    %v380 = vpack.c.bf16 %v310, %v310
    %v381 = vpack.c.bf16 %v317, %v317
    %s382 = scalar_lea.vmem [#allocation6], 256
    %v383 = vld [vmem:[%s382] sm:$0xff]
    %v384 = vld [vmem:[%s382 + $0x8] sm:$0xff]
    %v385 = vld [vmem:[%s382 + $0x10] sm:$0xff]
    %v386 = vld [vmem:[%s382 + $0x18] sm:$0xff]
    %v387 = vld [vmem:[%s382 + $0x20] sm:$0xff]
    %v388 = vld [vmem:[%s382 + $0x28] sm:$0xff]
    %v389 = vld [vmem:[%s382 + $0x30] sm:$0xff]
    %v390 = vld [vmem:[%s382 + $0x38] sm:$0xff]
    %v391 = vld [vmem:[%s382 + $0x40] sm:$0xff]
    %v392 = vld [vmem:[%s382 + $0x48] sm:$0xff]
    %v393 = vld [vmem:[%s382 + $0x50] sm:$0xff]
    %v394 = vld [vmem:[%s382 + $0x58] sm:$0xff]
    %v395 = vld [vmem:[%s382 + $0x60] sm:$0xff]
    %v396 = vld [vmem:[%s382 + $0x68] sm:$0xff]
    %v397 = vld [vmem:[%s382 + $0x70] sm:$0xff]
    %v398 = vld [vmem:[%s382 + $0x78] sm:$0xff]
    %v399 = vld [vmem:[%s382 + $0x80] sm:$0xff]
    %v400 = vld [vmem:[%s382 + $0x88] sm:$0xff]
    %v401 = vld [vmem:[%s382 + $0x90] sm:$0xff]
    %v402 = vld [vmem:[%s382 + $0x98] sm:$0xff]
    %v403 = vld [vmem:[%s382 + $0xa0] sm:$0xff]
    %v404 = vld [vmem:[%s382 + $0xa8] sm:$0xff]
    %v405 = vld [vmem:[%s382 + $0xb0] sm:$0xff]
    %v406 = vld [vmem:[%s382 + $0xb8] sm:$0xff]
    %v407 = vld [vmem:[%s382 + $0xc0] sm:$0xff]
    %v408 = vld [vmem:[%s382 + $0xc8] sm:$0xff]
    %v409 = vld [vmem:[%s382 + $0xd0] sm:$0xff]
    %v410 = vld [vmem:[%s382 + $0xd8] sm:$0xff]
    %v411 = vld [vmem:[%s382 + $0xe0] sm:$0xff]
    %v412 = vld [vmem:[%s382 + $0xe8] sm:$0xff]
    %v413 = vld [vmem:[%s382 + $0xf0] sm:$0xff]
    %v414 = vld [vmem:[%s382 + $0xf8] sm:$0xff]
    %v431 = vunpack.c.l.b16 %v366
    %v432 = vunpack.c.l.b16 %v367
    %v433 = vunpack.c.l.b16 %v368
    %v434 = vunpack.c.l.b16 %v369
    %v435 = vunpack.c.l.b16 %v370
    %v436 = vunpack.c.l.b16 %v371
    %v437 = vunpack.c.l.b16 %v372
    %v438 = vunpack.c.l.b16 %v373
    %v439 = vunpack.c.l.b16 %v374
    %v440 = vunpack.c.l.b16 %v375
    %v441 = vunpack.c.l.b16 %v376
    %v442 = vunpack.c.l.b16 %v377
    %v443 = vunpack.c.l.b16 %v378
    %v444 = vunpack.c.l.b16 %v379
    %v445 = vunpack.c.l.b16 %v380
    %v446 = vunpack.c.l.b16 %v381
    %vm447 = vcmask 1041409
    %v448 = vsel %vm447, %v433, %v431
    %vm449 = vcmask 1042434
    %v450 = vsel %vm449, %v435, %v448
    %vm451 = vcmask 1043459
    %v452 = vsel %vm451, %v437, %v450
    %vm453 = vcmask 1044484
    %v454 = vsel %vm453, %v439, %v452
    %vm455 = vcmask 1045509
    %v456 = vsel %vm455, %v441, %v454
    %vm457 = vcmask 1046534
    %v458 = vsel %vm457, %v443, %v456
    %vm459 = vcmask 1047559
    %v460 = vsel %vm459, %v445, %v458
    %v461 = vsel %vm447, %v434, %v432
    %v462 = vsel %vm449, %v436, %v461
    %v463 = vsel %vm451, %v438, %v462
    %v464 = vsel %vm453, %v440, %v463
    %v465 = vsel %vm455, %v442, %v464
    %v466 = vsel %vm457, %v444, %v465
    %v467 = vsel %vm459, %v446, %v466
    %v468 = vpack.c.b16 %v460, %v460
    %v469 = vpack.c.b16 %v467, %v467
    %v504 = vunpack.c.l.b16 %v383
    %v505 = vunpack.c.h.b16 %v383
    %v506 = vunpack.c.l.b16 %v384
    %v507 = vunpack.c.h.b16 %v384
    %v508 = vunpack.c.l.b16 %v385
    %v509 = vunpack.c.h.b16 %v385
    %v510 = vunpack.c.l.b16 %v386
    %v511 = vunpack.c.h.b16 %v386
    %v512 = vunpack.c.l.b16 %v387
    %v513 = vunpack.c.h.b16 %v387
    %v514 = vunpack.c.l.b16 %v388
    %v515 = vunpack.c.h.b16 %v388
    %v516 = vunpack.c.l.b16 %v389
    %v517 = vunpack.c.h.b16 %v389
    %v518 = vunpack.c.l.b16 %v390
    %v519 = vunpack.c.h.b16 %v390
    %v520 = vunpack.c.l.b16 %v391
    %v521 = vunpack.c.h.b16 %v391
    %v522 = vunpack.c.l.b16 %v392
    %v523 = vunpack.c.h.b16 %v392
    %v524 = vunpack.c.l.b16 %v393
    %v525 = vunpack.c.h.b16 %v393
    %v526 = vunpack.c.l.b16 %v394
    %v527 = vunpack.c.h.b16 %v394
    %v528 = vunpack.c.l.b16 %v395
    %v529 = vunpack.c.h.b16 %v395
    %v530 = vunpack.c.l.b16 %v396
    %v531 = vunpack.c.h.b16 %v396
    %v532 = vunpack.c.l.b16 %v397
    %v533 = vunpack.c.h.b16 %v397
    %v534 = vunpack.c.l.b16 %v398
    %v535 = vunpack.c.h.b16 %v398
    %v536 = vunpack.c.l.b16 %v399
    %v537 = vunpack.c.h.b16 %v399
    %v538 = vunpack.c.l.b16 %v400
    %v539 = vunpack.c.h.b16 %v400
    %v540 = vunpack.c.l.b16 %v401
    %v541 = vunpack.c.h.b16 %v401
    %v542 = vunpack.c.l.b16 %v402
    %v543 = vunpack.c.h.b16 %v402
    %v544 = vunpack.c.l.b16 %v403
    %v545 = vunpack.c.h.b16 %v403
    %v546 = vunpack.c.l.b16 %v404
    %v547 = vunpack.c.h.b16 %v404
    %v548 = vunpack.c.l.b16 %v405
    %v549 = vunpack.c.h.b16 %v405
    %v550 = vunpack.c.l.b16 %v406
    %v551 = vunpack.c.h.b16 %v406
    %v552 = vunpack.c.l.b16 %v407
    %v553 = vunpack.c.h.b16 %v407
    %v554 = vunpack.c.l.b16 %v408
    %v555 = vunpack.c.h.b16 %v408
    %v556 = vunpack.c.l.b16 %v409
    %v557 = vunpack.c.h.b16 %v409
    %v558 = vunpack.c.l.b16 %v410
    %v559 = vunpack.c.h.b16 %v410
    %v560 = vunpack.c.l.b16 %v411
    %v561 = vunpack.c.h.b16 %v411
    %v562 = vunpack.c.l.b16 %v412
    %v563 = vunpack.c.h.b16 %v412
    %v564 = vunpack.c.l.b16 %v413
    %v565 = vunpack.c.h.b16 %v413
    %v566 = vunpack.c.l.b16 %v414
    %v567 = vunpack.c.h.b16 %v414
    %v568 = vpack.c.b16 %v506, %v504
    %v569 = vpack.c.b16 %v507, %v505
    %v570 = vpack.c.b16 %v510, %v508
    %v571 = vpack.c.b16 %v511, %v509
    %v572 = vpack.c.b16 %v514, %v512
    %v573 = vpack.c.b16 %v515, %v513
    %v574 = vpack.c.b16 %v518, %v516
    %v575 = vpack.c.b16 %v519, %v517
    %v576 = vpack.c.b16 %v522, %v520
    %v577 = vpack.c.b16 %v523, %v521
    %v578 = vpack.c.b16 %v526, %v524
    %v579 = vpack.c.b16 %v527, %v525
    %v580 = vpack.c.b16 %v530, %v528
    %v581 = vpack.c.b16 %v531, %v529
    %v582 = vpack.c.b16 %v534, %v532
    %v583 = vpack.c.b16 %v535, %v533
    %v584 = vpack.c.b16 %v538, %v536
    %v585 = vpack.c.b16 %v539, %v537
    %v586 = vpack.c.b16 %v542, %v540
    %v587 = vpack.c.b16 %v543, %v541
    %v588 = vpack.c.b16 %v546, %v544
    %v589 = vpack.c.b16 %v547, %v545
    %v590 = vpack.c.b16 %v550, %v548
    %v591 = vpack.c.b16 %v551, %v549
    %v592 = vpack.c.b16 %v554, %v552
    %v593 = vpack.c.b16 %v555, %v553
    %v594 = vpack.c.b16 %v558, %v556
    %v595 = vpack.c.b16 %v559, %v557
    %v596 = vpack.c.b16 %v562, %v560
    %v597 = vpack.c.b16 %v563, %v561
    %v598 = vpack.c.b16 %v566, %v564
    %v599 = vpack.c.b16 %v567, %v565
    %632 = vmatprep.subr.bf16.mxu0 %v569
    %633 = vmatpush1.bf16.msra.mxu0 %v568
    %634 = vmatprep.subr.bf16.mxu0 %v571
    %635 = vmatpush1.bf16.msra.mxu0 %v570
    %636 = vmatprep.subr.bf16.mxu0 %v573
    %637 = vmatpush1.bf16.msra.mxu0 %v572
    %638 = vmatprep.subr.bf16.mxu0 %v575
    %639 = vmatpush1.bf16.msra.mxu0 %v574
    %640 = vmatprep.subr.bf16.mxu0 %v577
    %641 = vmatpush1.bf16.msra.mxu0 %v576
    %642 = vmatprep.subr.bf16.mxu0 %v579
    %643 = vmatpush1.bf16.msra.mxu0 %v578
    %644 = vmatprep.subr.bf16.mxu0 %v581
    %645 = vmatpush1.bf16.msra.mxu0 %v580
    %646 = vmatprep.subr.bf16.mxu0 %v583
    %647 = vmatpush1.bf16.msra.mxu0 %v582
    %648 = vmatprep.subr.bf16.mxu0 %v585
    %649 = vmatpush1.bf16.msra.mxu0 %v584
    %650 = vmatprep.subr.bf16.mxu0 %v587
    %651 = vmatpush1.bf16.msra.mxu0 %v586
    %652 = vmatprep.subr.bf16.mxu0 %v589
    %653 = vmatpush1.bf16.msra.mxu0 %v588
    %654 = vmatprep.subr.bf16.mxu0 %v591
    %655 = vmatpush1.bf16.msra.mxu0 %v590
    %656 = vmatprep.subr.bf16.mxu0 %v593
    %657 = vmatpush1.bf16.msra.mxu0 %v592
    %658 = vmatprep.subr.bf16.mxu0 %v595
    %659 = vmatpush1.bf16.msra.mxu0 %v594
    %660 = vmatprep.subr.bf16.mxu0 %v597
    %661 = vmatpush1.bf16.msra.mxu0 %v596
    %662 = vmatprep.subr.bf16.mxu0 %v599
    %663 = vmatpush1.bf16.msra.mxu0 %v598
    %664 = vmatprep.mubr.bf16.mxu0 %v469
    %665 = vmatmul.mubr.bf16.gmra.mrb[0].mxu0 %v468
    %v666 = vpop.f32.mrb[0].mxu0
    %v667 = vadd.f32 0.0, %v666
    %v668 = vpop.f32.mrb[0].mxu0
    %v669 = vadd.f32 0.0, %v668
    %v670 = vpop.f32.mrb[0].mxu0
    %v671 = vpop.f32.mrb[0].mxu0
    %672 = vdwg.mxu0
    %v689 = vunpack.c.l.b16 %v318
    %v690 = vunpack.c.l.b16 %v319
    %v691 = vunpack.c.l.b16 %v320
    %v692 = vunpack.c.l.b16 %v321
    %v693 = vunpack.c.l.b16 %v322
    %v694 = vunpack.c.l.b16 %v323
    %v695 = vunpack.c.l.b16 %v324
    %v696 = vunpack.c.l.b16 %v325
    %v697 = vunpack.c.l.b16 %v326
    %v698 = vunpack.c.l.b16 %v327
    %v699 = vunpack.c.l.b16 %v328
    %v700 = vunpack.c.l.b16 %v329
    %v701 = vunpack.c.l.b16 %v330
    %v702 = vunpack.c.l.b16 %v331
    %v703 = vunpack.c.l.b16 %v332
    %v704 = vunpack.c.l.b16 %v333
    %v705 = vsel %vm447, %v691, %v689
    %v706 = vsel %vm449, %v693, %v705
    %v707 = vsel %vm451, %v695, %v706
    %v708 = vsel %vm453, %v697, %v707
    %v709 = vsel %vm455, %v699, %v708
    %v710 = vsel %vm457, %v701, %v709
    %v711 = vsel %vm459, %v703, %v710
    %v712 = vsel %vm447, %v692, %v690
    %v713 = vsel %vm449, %v694, %v712
    %v714 = vsel %vm451, %v696, %v713
    %v715 = vsel %vm453, %v698, %v714
    %v716 = vsel %vm455, %v700, %v715
    %v717 = vsel %vm457, %v702, %v716
    %v718 = vsel %vm459, %v704, %v717
    %v719 = vpack.c.b16 %v711, %v711
    %v720 = vpack.c.b16 %v718, %v718
    %v755 = vunpack.c.l.b16 %v334
    %v756 = vunpack.c.h.b16 %v334
    %v757 = vunpack.c.l.b16 %v335
    %v758 = vunpack.c.h.b16 %v335
    %v759 = vunpack.c.l.b16 %v336
    %v760 = vunpack.c.h.b16 %v336
    %v761 = vunpack.c.l.b16 %v337
    %v762 = vunpack.c.h.b16 %v337
    %v763 = vunpack.c.l.b16 %v338
    %v764 = vunpack.c.h.b16 %v338
    %v765 = vunpack.c.l.b16 %v339
    %v766 = vunpack.c.h.b16 %v339
    %v767 = vunpack.c.l.b16 %v340
    %v768 = vunpack.c.h.b16 %v340
    %v769 = vunpack.c.l.b16 %v341
    %v770 = vunpack.c.h.b16 %v341
    %v771 = vunpack.c.l.b16 %v342
    %v772 = vunpack.c.h.b16 %v342
    %v773 = vunpack.c.l.b16 %v343
    %v774 = vunpack.c.h.b16 %v343
    %v775 = vunpack.c.l.b16 %v344
    %v776 = vunpack.c.h.b16 %v344
    %v777 = vunpack.c.l.b16 %v345
    %v778 = vunpack.c.h.b16 %v345
    %v779 = vunpack.c.l.b16 %v346
    %v780 = vunpack.c.h.b16 %v346
    %v781 = vunpack.c.l.b16 %v347
    %v782 = vunpack.c.h.b16 %v347
    %v783 = vunpack.c.l.b16 %v348
    %v784 = vunpack.c.h.b16 %v348
    %v785 = vunpack.c.l.b16 %v349
    %v786 = vunpack.c.h.b16 %v349
    %v787 = vunpack.c.l.b16 %v350
    %v788 = vunpack.c.h.b16 %v350
    %v789 = vunpack.c.l.b16 %v351
    %v790 = vunpack.c.h.b16 %v351
    %v791 = vunpack.c.l.b16 %v352
    %v792 = vunpack.c.h.b16 %v352
    %v793 = vunpack.c.l.b16 %v353
    %v794 = vunpack.c.h.b16 %v353
    %v795 = vunpack.c.l.b16 %v354
    %v796 = vunpack.c.h.b16 %v354
    %v797 = vunpack.c.l.b16 %v355
    %v798 = vunpack.c.h.b16 %v355
    %v799 = vunpack.c.l.b16 %v356
    %v800 = vunpack.c.h.b16 %v356
    %v801 = vunpack.c.l.b16 %v357
    %v802 = vunpack.c.h.b16 %v357
    %v803 = vunpack.c.l.b16 %v358
    %v804 = vunpack.c.h.b16 %v358
    %v805 = vunpack.c.l.b16 %v359
    %v806 = vunpack.c.h.b16 %v359
    %v807 = vunpack.c.l.b16 %v360
    %v808 = vunpack.c.h.b16 %v360
    %v809 = vunpack.c.l.b16 %v361
    %v810 = vunpack.c.h.b16 %v361
    %v811 = vunpack.c.l.b16 %v362
    %v812 = vunpack.c.h.b16 %v362
    %v813 = vunpack.c.l.b16 %v363
    %v814 = vunpack.c.h.b16 %v363
    %v815 = vunpack.c.l.b16 %v364
    %v816 = vunpack.c.h.b16 %v364
    %v817 = vunpack.c.l.b16 %v365
    %v818 = vunpack.c.h.b16 %v365
    %v819 = vpack.c.b16 %v757, %v755
    %v820 = vpack.c.b16 %v758, %v756
    %v821 = vpack.c.b16 %v761, %v759
    %v822 = vpack.c.b16 %v762, %v760
    %v823 = vpack.c.b16 %v765, %v763
    %v824 = vpack.c.b16 %v766, %v764
    %v825 = vpack.c.b16 %v769, %v767
    %v826 = vpack.c.b16 %v770, %v768
    %v827 = vpack.c.b16 %v773, %v771
    %v828 = vpack.c.b16 %v774, %v772
    %v829 = vpack.c.b16 %v777, %v775
    %v830 = vpack.c.b16 %v778, %v776
    %v831 = vpack.c.b16 %v781, %v779
    %v832 = vpack.c.b16 %v782, %v780
    %v833 = vpack.c.b16 %v785, %v783
    %v834 = vpack.c.b16 %v786, %v784
    %v835 = vpack.c.b16 %v789, %v787
    %v836 = vpack.c.b16 %v790, %v788
    %v837 = vpack.c.b16 %v793, %v791
    %v838 = vpack.c.b16 %v794, %v792
    %v839 = vpack.c.b16 %v797, %v795
    %v840 = vpack.c.b16 %v798, %v796
    %v841 = vpack.c.b16 %v801, %v799
    %v842 = vpack.c.b16 %v802, %v800
    %v843 = vpack.c.b16 %v805, %v803
    %v844 = vpack.c.b16 %v806, %v804
    %v845 = vpack.c.b16 %v809, %v807
    %v846 = vpack.c.b16 %v810, %v808
    %v847 = vpack.c.b16 %v813, %v811
    %v848 = vpack.c.b16 %v814, %v812
    %v849 = vpack.c.b16 %v817, %v815
    %v850 = vpack.c.b16 %v818, %v816
    %883 = vmatprep.subr.bf16.mxu0 %v820
    %884 = vmatpush1.bf16.msra.mxu0 %v819
    %885 = vmatprep.subr.bf16.mxu0 %v822
    %886 = vmatpush1.bf16.msra.mxu0 %v821
    %887 = vmatprep.subr.bf16.mxu0 %v824
    %888 = vmatpush1.bf16.msra.mxu0 %v823
    %889 = vmatprep.subr.bf16.mxu0 %v826
    %890 = vmatpush1.bf16.msra.mxu0 %v825
    %891 = vmatprep.subr.bf16.mxu0 %v828
    %892 = vmatpush1.bf16.msra.mxu0 %v827
    %893 = vmatprep.subr.bf16.mxu0 %v830
    %894 = vmatpush1.bf16.msra.mxu0 %v829
    %895 = vmatprep.subr.bf16.mxu0 %v832
    %896 = vmatpush1.bf16.msra.mxu0 %v831
    %897 = vmatprep.subr.bf16.mxu0 %v834
    %898 = vmatpush1.bf16.msra.mxu0 %v833
    %899 = vmatprep.subr.bf16.mxu0 %v836
    %900 = vmatpush1.bf16.msra.mxu0 %v835
    %901 = vmatprep.subr.bf16.mxu0 %v838
    %902 = vmatpush1.bf16.msra.mxu0 %v837
    %903 = vmatprep.subr.bf16.mxu0 %v840
    %904 = vmatpush1.bf16.msra.mxu0 %v839
    %905 = vmatprep.subr.bf16.mxu0 %v842
    %906 = vmatpush1.bf16.msra.mxu0 %v841
    %907 = vmatprep.subr.bf16.mxu0 %v844
    %908 = vmatpush1.bf16.msra.mxu0 %v843
    %909 = vmatprep.subr.bf16.mxu0 %v846
    %910 = vmatpush1.bf16.msra.mxu0 %v845
    %911 = vmatprep.subr.bf16.mxu0 %v848
    %912 = vmatpush1.bf16.msra.mxu0 %v847
    %913 = vmatprep.subr.bf16.mxu0 %v850
    %914 = vmatpush1.bf16.msra.mxu0 %v849
    %915 = vmatprep.mubr.bf16.mxu0 %v720
    %916 = vmatmul.mubr.bf16.gmra.mrb[0].mxu0 %v719
    %v917 = vpop.f32.mrb[0].mxu0
    %v918 = vadd.f32 %v667, %v917
    %v919 = vpop.f32.mrb[0].mxu0
    %v920 = vadd.f32 %v669, %v919
    %v921 = vpop.f32.mrb[0].mxu0
    %v922 = vpop.f32.mrb[0].mxu0
    %923 = vdwg.mxu0
    %s924 = sld [smem:[#allocation2]]
    %v925 = vstv %s924
    %v926 = vadd.f32 %v918, %v925
    %v927 = vadd.f32 %v920, %v925
    %v928 = vxor.u32 %v926, 2147483648
    %v929 = vxor.u32 %v927, 2147483648
    %v930 = vmul.f32 %v928, 1.442695
    %v931 = vpow.pop %v930
    %v932 = vmul.f32 %v929, 1.442695
    %v933 = vpow.pop %v932
    %v934 = vadd.f32 %v931, 1.0
    %v935 = vadd.f32 %v933, 1.0
    %v936 = vrcp.pop %v934
    %v937 = vmul.f32 1.0, %v936
    %v938 = vrcp.pop %v935
    %v939 = vmul.f32 1.0, %v938
    %940 = vst [vmem:[#allocation8] sm:$0xff] %v937
    %941 = vst [vmem:[#allocation8 + $0x8] sm:$0xff] %v939
    // Predicated region
    $region22: #{tpu_custom_call.1} parent=1 // pred_check
      _
    $region23: #{tpu_custom_call.1} parent=1 // pred_check_branch
      %943 = sbr.rel (0) target = $region25
    $region24: #{tpu_custom_call.1} parent=1 // pred_region
      %s945 = ssub.s32 256, 256
      %946 = vsyncadd [#allocation5], %s945
      %s948 = sshll.u32 [#allocation8], 4
      %s949 = int_to_ptr.vmem [resolvable:$true] %s948
      %951 = dma.vmem_to_hbm [thread:$0]  %s949, 256, %s3, [#allocation5]
    $region25: #{tpu_custom_call.1} parent=1 // pred_fallthru
      _
    // Predicated region
    $region26: #{tpu_custom_call.1} parent=1 // pred_check
      _
    $region27: #{tpu_custom_call.1} parent=1 // pred_check_branch
      %953 = sbr.rel (0) target = $region29
    $region28: #{tpu_custom_call.1} parent=1 // pred_region
      %954 = dma.done [#allocation5], 256
    $region29: #{tpu_custom_call.1} parent=1 // pred_fallthru
      _
    %955 = vsyncpa [#allocation4], 1
    %956 = vsyncpa [#allocation7], 1
    %957 = vsyncpa [#allocation5], 1

// kernel: tpu_custom_call.1
$region0: #{tpu_custom_call.1}
  #allocation0 [shape = 'u32[]', space=smem, size = 0x4, offset = 0x4, fixed_abs, tag = 'smem constant byte address 0x4 - core index']
  #allocation1 [shape = 'u32[144,128]{1,0:T(1,128)}', space=vmem, size = 0x12000, scoped, tag = 'internal scratch']
  #allocation2 [shape = 'f32[1]{0:T(128)S(6)}', space=smem, size = 0x200, scoped, tag = 'scoped memory for tpu_custom_call.1']
  %s0 = inlined_call_operand.hbm [shape: f32[8,4,256], index: 0, kind: input, shape index: {}]
  %s1 = inlined_call_operand.hbm [shape: bf16[2,256,256], index: 1, kind: input, shape index: {}]
  %s2 = inlined_call_operand.<no memory space> [shape: f32[1], index: 2, kind: input, shape index: {}]
  %s3 = inlined_call_operand.hbm [shape: f32[8,256], index: 3, kind: output, shape index: {}]
  %s4 = sld [smem:[#allocation0]]
  $region30: #{tpu_custom_call.1} parent=0
    _
  %s6 = ssub.s32 1, %s4
  %s7 = scalar_select 0, %s6, %s4
  %8 = sst [smem:[#allocation2]] %s2
  $region1: #{tpu_custom_call.1} parent=0
    #allocation3 [shape = 'u8[32768]{0}', space=vmem, size = 0x8000, scoped, tag = 'input window, operand 0, single buffered']
    #allocation4 [shape = 's32[1]{0}', space=sflag, size = 0x4, scoped, tag = 'scoped memory for tpu_custom_call.1']
    #allocation5 [shape = 's32[1]{0}', space=sflag, size = 0x4, scoped, tag = 'scoped memory for tpu_custom_call.1']
    #allocation6 [shape = 'u8[262144]{0}', space=vmem, size = 0x40000, scoped, tag = 'input window, operand 1, single buffered']
    #allocation7 [shape = 's32[1]{0}', space=sflag, size = 0x4, scoped, tag = 'scoped memory for tpu_custom_call.1']
    #allocation8 [shape = 'u8[8192]{0}', space=vmem, size = 0x2000, scoped, tag = 'output window, operand 0, single buffered']
    %9 = vsyncpa [#allocation4], 0
    %10 = vsyncpa [#allocation7], 0
    %11 = vsyncpa [#allocation5], 0
    // Predicated region
    $region2: #{tpu_custom_call.1} parent=1 // pred_check
      _
    $region3: #{tpu_custom_call.1} parent=1 // pred_check_branch
      %13 = sbr.rel (0) target = $region5
    $region4: #{tpu_custom_call.1} parent=1 // pred_region
      %s15 = ssub.s32 1024, 1024
      %16 = vsyncadd [#allocation4], %s15
      %s17 = sshll.u32 [#allocation3], 4
      %s18 = int_to_ptr.vmem [resolvable:$true] %s17
      %23 = dma.hbm_to_vmem [thread:$0]  %s0, 1024, %s18, [#allocation4], 128, 128, 8
    $region5: #{tpu_custom_call.1} parent=1 // pred_fallthru
      _
    // Predicated region
    $region6: #{tpu_custom_call.1} parent=1 // pred_check
      _
    $region7: #{tpu_custom_call.1} parent=1 // pred_check_branch
      %25 = sbr.rel (0) target = $region9
    $region8: #{tpu_custom_call.1} parent=1 // pred_region
      %s27 = ssub.s32 8192, 8192
      %28 = vsyncadd [#allocation7], %s27
      %s29 = sshll.u32 [#allocation6], 4
      %s30 = int_to_ptr.vmem [resolvable:$true] %s29
      %35 = dma.hbm_to_vmem [thread:$0]  %s1, 8192, %s30, [#allocation7], 128, 128, 8
    $region9: #{tpu_custom_call.1} parent=1 // pred_fallthru
      _
    // Predicated region
    $region10: #{tpu_custom_call.1} parent=1 // pred_check
      _
    $region11: #{tpu_custom_call.1} parent=1 // pred_check_branch
      %37 = sbr.rel (0) target = $region13
    $region12: #{tpu_custom_call.1} parent=1 // pred_region
      _
    $region13: #{tpu_custom_call.1} parent=1 // pred_fallthru
      _
    // Predicated region
    $region14: #{tpu_custom_call.1} parent=1 // pred_check
      _
    $region15: #{tpu_custom_call.1} parent=1 // pred_check_branch
      %39 = sbr.rel (0) target = $region17
    $region16: #{tpu_custom_call.1} parent=1 // pred_region
      %40 = dma.done [#allocation4], 1024
    $region17: #{tpu_custom_call.1} parent=1 // pred_fallthru
      _
    // Predicated region
    $region18: #{tpu_custom_call.1} parent=1 // pred_check
      _
    $region19: #{tpu_custom_call.1} parent=1 // pred_check_branch
      %42 = sbr.rel (0) target = $region21
    $region20: #{tpu_custom_call.1} parent=1 // pred_region
      %43 = dma.done [#allocation7], 8192
    $region21: #{tpu_custom_call.1} parent=1 // pred_fallthru
      _
    %v44 = vld [vmem:[#allocation3] sm:$0xff]
    %v45 = vld [vmem:[#allocation3 + $0x8] sm:$0xff]
    %v46 = vld [vmem:[#allocation3 + $0x10] sm:$0xff]
    %v47 = vld [vmem:[#allocation3 + $0x18] sm:$0xff]
    %v48 = vld [vmem:[#allocation3 + $0x20] sm:$0xff]
    %v49 = vld [vmem:[#allocation3 + $0x28] sm:$0xff]
    %v50 = vld [vmem:[#allocation3 + $0x30] sm:$0xff]
    %v51 = vld [vmem:[#allocation3 + $0x38] sm:$0xff]
    %v60 = vcombine.high %v44, %v44
    %v61 = vcombine.high %v45, %v45
    %v62 = vcombine.high %v46, %v46
    %v63 = vcombine.high %v47, %v47
    %v64 = vcombine.high %v48, %v48
    %v65 = vcombine.high %v49, %v49
    %v66 = vcombine.high %v50, %v50
    %v67 = vcombine.high %v51, %v51
    %vm76 = vcmask 1043456
    %v77 = vsel %vm76, %v44, 0.0
    %v78 = vrot.slane %v77, 4
    %v79 = vadd.f32 %v77, %v78
    %v80 = vrot.slane %v79, 2
    %v81 = vadd.f32 %v79, %v80
    %v82 = vrot.slane %v81, 1
    %v83 = vadd.f32 %v81, %v82
    %v84 = vsel %vm76, %v60, 0.0
    %v85 = vrot.slane %v84, 4
    %v86 = vadd.f32 %v84, %v85
    %v87 = vrot.slane %v86, 2
    %v88 = vadd.f32 %v86, %v87
    %v89 = vrot.slane %v88, 1
    %v90 = vadd.f32 %v88, %v89
    %v91 = vsel %vm76, %v45, 0.0
    %v92 = vrot.slane %v91, 4
    %v93 = vadd.f32 %v91, %v92
    %v94 = vrot.slane %v93, 2
    %v95 = vadd.f32 %v93, %v94
    %v96 = vrot.slane %v95, 1
    %v97 = vadd.f32 %v95, %v96
    %v98 = vsel %vm76, %v61, 0.0
    %v99 = vrot.slane %v98, 4
    %v100 = vadd.f32 %v98, %v99
    %v101 = vrot.slane %v100, 2
    %v102 = vadd.f32 %v100, %v101
    %v103 = vrot.slane %v102, 1
    %v104 = vadd.f32 %v102, %v103
    %v105 = vsel %vm76, %v46, 0.0
    %v106 = vrot.slane %v105, 4
    %v107 = vadd.f32 %v105, %v106
    %v108 = vrot.slane %v107, 2
    %v109 = vadd.f32 %v107, %v108
    %v110 = vrot.slane %v109, 1
    %v111 = vadd.f32 %v109, %v110
    %v112 = vsel %vm76, %v62, 0.0
    %v113 = vrot.slane %v112, 4
    %v114 = vadd.f32 %v112, %v113
    %v115 = vrot.slane %v114, 2
    %v116 = vadd.f32 %v114, %v115
    %v117 = vrot.slane %v116, 1
    %v118 = vadd.f32 %v116, %v117
    %v119 = vsel %vm76, %v47, 0.0
    %v120 = vrot.slane %v119, 4
    %v121 = vadd.f32 %v119, %v120
    %v122 = vrot.slane %v121, 2
    %v123 = vadd.f32 %v121, %v122
    %v124 = vrot.slane %v123, 1
    %v125 = vadd.f32 %v123, %v124
    %v126 = vsel %vm76, %v63, 0.0
    %v127 = vrot.slane %v126, 4
    %v128 = vadd.f32 %v126, %v127
    %v129 = vrot.slane %v128, 2
    %v130 = vadd.f32 %v128, %v129
    %v131 = vrot.slane %v130, 1
    %v132 = vadd.f32 %v130, %v131
    %v133 = vsel %vm76, %v48, 0.0
    %v134 = vrot.slane %v133, 4
    %v135 = vadd.f32 %v133, %v134
    %v136 = vrot.slane %v135, 2
    %v137 = vadd.f32 %v135, %v136
    %v138 = vrot.slane %v137, 1
    %v139 = vadd.f32 %v137, %v138
    %v140 = vsel %vm76, %v64, 0.0
    %v141 = vrot.slane %v140, 4
    %v142 = vadd.f32 %v140, %v141
    %v143 = vrot.slane %v142, 2
    %v144 = vadd.f32 %v142, %v143
    %v145 = vrot.slane %v144, 1
    %v146 = vadd.f32 %v144, %v145
    %v147 = vsel %vm76, %v49, 0.0
    %v148 = vrot.slane %v147, 4
    %v149 = vadd.f32 %v147, %v148
    %v150 = vrot.slane %v149, 2
    %v151 = vadd.f32 %v149, %v150
    %v152 = vrot.slane %v151, 1
    %v153 = vadd.f32 %v151, %v152
    %v154 = vsel %vm76, %v65, 0.0
    %v155 = vrot.slane %v154, 4
    %v156 = vadd.f32 %v154, %v155
    %v157 = vrot.slane %v156, 2
    %v158 = vadd.f32 %v156, %v157
    %v159 = vrot.slane %v158, 1
    %v160 = vadd.f32 %v158, %v159
    %v161 = vsel %vm76, %v50, 0.0
    %v162 = vrot.slane %v161, 4
    %v163 = vadd.f32 %v161, %v162
    %v164 = vrot.slane %v163, 2
    %v165 = vadd.f32 %v163, %v164
    %v166 = vrot.slane %v165, 1
    %v167 = vadd.f32 %v165, %v166
    %v168 = vsel %vm76, %v66, 0.0
    %v169 = vrot.slane %v168, 4
    %v170 = vadd.f32 %v168, %v169
    %v171 = vrot.slane %v170, 2
    %v172 = vadd.f32 %v170, %v171
    %v173 = vrot.slane %v172, 1
    %v174 = vadd.f32 %v172, %v173
    %v175 = vsel %vm76, %v51, 0.0
    %v176 = vrot.slane %v175, 4
    %v177 = vadd.f32 %v175, %v176
    %v178 = vrot.slane %v177, 2
    %v179 = vadd.f32 %v177, %v178
    %v180 = vrot.slane %v179, 1
    %v181 = vadd.f32 %v179, %v180
    %v182 = vsel %vm76, %v67, 0.0
    %v183 = vrot.slane %v182, 4
    %v184 = vadd.f32 %v182, %v183
    %v185 = vrot.slane %v184, 2
    %v186 = vadd.f32 %v184, %v185
    %v187 = vrot.slane %v186, 1
    %v188 = vadd.f32 %v186, %v187
    %v189 = vrcp.pop 4.0
    %v190 = vmul.f32 %v83, %v189
    %v191 = vmul.f32 %v90, %v189
    %v192 = vmul.f32 %v97, %v189
    %v193 = vmul.f32 %v104, %v189
    %v194 = vmul.f32 %v111, %v189
    %v195 = vmul.f32 %v118, %v189
    %v196 = vmul.f32 %v125, %v189
    %v197 = vmul.f32 %v132, %v189
    %v198 = vmul.f32 %v139, %v189
    %v199 = vmul.f32 %v146, %v189
    %v200 = vmul.f32 %v153, %v189
    %v201 = vmul.f32 %v160, %v189
    %v202 = vmul.f32 %v167, %v189
    %v203 = vmul.f32 %v174, %v189
    %v204 = vmul.f32 %v181, %v189
    %v205 = vmul.f32 %v188, %v189
    %v206 = vsel %vm76, %v44, -inf
    %v207 = vrot.slane %v206, 4
    %v208 = vmax.f32 %v206, %v207
    %v209 = vrot.slane %v208, 2
    %v210 = vmax.f32 %v208, %v209
    %v211 = vrot.slane %v210, 1
    %v212 = vmax.f32 %v210, %v211
    %v213 = vsel %vm76, %v60, -inf
    %v214 = vrot.slane %v213, 4
    %v215 = vmax.f32 %v213, %v214
    %v216 = vrot.slane %v215, 2
    %v217 = vmax.f32 %v215, %v216
    %v218 = vrot.slane %v217, 1
    %v219 = vmax.f32 %v217, %v218
    %v220 = vsel %vm76, %v45, -inf
    %v221 = vrot.slane %v220, 4
    %v222 = vmax.f32 %v220, %v221
    %v223 = vrot.slane %v222, 2
    %v224 = vmax.f32 %v222, %v223
    %v225 = vrot.slane %v224, 1
    %v226 = vmax.f32 %v224, %v225
    %v227 = vsel %vm76, %v61, -inf
    %v228 = vrot.slane %v227, 4
    %v229 = vmax.f32 %v227, %v228
    %v230 = vrot.slane %v229, 2
    %v231 = vmax.f32 %v229, %v230
    %v232 = vrot.slane %v231, 1
    %v233 = vmax.f32 %v231, %v232
    %v234 = vsel %vm76, %v46, -inf
    %v235 = vrot.slane %v234, 4
    %v236 = vmax.f32 %v234, %v235
    %v237 = vrot.slane %v236, 2
    %v238 = vmax.f32 %v236, %v237
    %v239 = vrot.slane %v238, 1
    %v240 = vmax.f32 %v238, %v239
    %v241 = vsel %vm76, %v62, -inf
    %v242 = vrot.slane %v241, 4
    %v243 = vmax.f32 %v241, %v242
    %v244 = vrot.slane %v243, 2
    %v245 = vmax.f32 %v243, %v244
    %v246 = vrot.slane %v245, 1
    %v247 = vmax.f32 %v245, %v246
    %v248 = vsel %vm76, %v47, -inf
    %v249 = vrot.slane %v248, 4
    %v250 = vmax.f32 %v248, %v249
    %v251 = vrot.slane %v250, 2
    %v252 = vmax.f32 %v250, %v251
    %v253 = vrot.slane %v252, 1
    %v254 = vmax.f32 %v252, %v253
    %v255 = vsel %vm76, %v63, -inf
    %v256 = vrot.slane %v255, 4
    %v257 = vmax.f32 %v255, %v256
    %v258 = vrot.slane %v257, 2
    %v259 = vmax.f32 %v257, %v258
    %v260 = vrot.slane %v259, 1
    %v261 = vmax.f32 %v259, %v260
    %v262 = vsel %vm76, %v48, -inf
    %v263 = vrot.slane %v262, 4
    %v264 = vmax.f32 %v262, %v263
    %v265 = vrot.slane %v264, 2
    %v266 = vmax.f32 %v264, %v265
    %v267 = vrot.slane %v266, 1
    %v268 = vmax.f32 %v266, %v267
    %v269 = vsel %vm76, %v64, -inf
    %v270 = vrot.slane %v269, 4
    %v271 = vmax.f32 %v269, %v270
    %v272 = vrot.slane %v271, 2
    %v273 = vmax.f32 %v271, %v272
    %v274 = vrot.slane %v273, 1
    %v275 = vmax.f32 %v273, %v274
    %v276 = vsel %vm76, %v49, -inf
    %v277 = vrot.slane %v276, 4
    %v278 = vmax.f32 %v276, %v277
    %v279 = vrot.slane %v278, 2
    %v280 = vmax.f32 %v278, %v279
    %v281 = vrot.slane %v280, 1
    %v282 = vmax.f32 %v280, %v281
    %v283 = vsel %vm76, %v65, -inf
    %v284 = vrot.slane %v283, 4
    %v285 = vmax.f32 %v283, %v284
    %v286 = vrot.slane %v285, 2
    %v287 = vmax.f32 %v285, %v286
    %v288 = vrot.slane %v287, 1
    %v289 = vmax.f32 %v287, %v288
    %v290 = vsel %vm76, %v50, -inf
    %v291 = vrot.slane %v290, 4
    %v292 = vmax.f32 %v290, %v291
    %v293 = vrot.slane %v292, 2
    %v294 = vmax.f32 %v292, %v293
    %v295 = vrot.slane %v294, 1
    %v296 = vmax.f32 %v294, %v295
    %v297 = vsel %vm76, %v66, -inf
    %v298 = vrot.slane %v297, 4
    %v299 = vmax.f32 %v297, %v298
    %v300 = vrot.slane %v299, 2
    %v301 = vmax.f32 %v299, %v300
    %v302 = vrot.slane %v301, 1
    %v303 = vmax.f32 %v301, %v302
    %v304 = vsel %vm76, %v51, -inf
    %v305 = vrot.slane %v304, 4
    %v306 = vmax.f32 %v304, %v305
    %v307 = vrot.slane %v306, 2
    %v308 = vmax.f32 %v306, %v307
    %v309 = vrot.slane %v308, 1
    %v310 = vmax.f32 %v308, %v309
    %v311 = vsel %vm76, %v67, -inf
    %v312 = vrot.slane %v311, 4
    %v313 = vmax.f32 %v311, %v312
    %v314 = vrot.slane %v313, 2
    %v315 = vmax.f32 %v313, %v314
    %v316 = vrot.slane %v315, 1
    %v317 = vmax.f32 %v315, %v316
    %v318 = vpack.c.bf16 %v190, %v190
    %v319 = vpack.c.bf16 %v191, %v191
    %v320 = vpack.c.bf16 %v192, %v192
    %v321 = vpack.c.bf16 %v193, %v193
    %v322 = vpack.c.bf16 %v194, %v194
    %v323 = vpack.c.bf16 %v195, %v195
    %v324 = vpack.c.bf16 %v196, %v196
    %v325 = vpack.c.bf16 %v197, %v197
    %v326 = vpack.c.bf16 %v198, %v198
    %v327 = vpack.c.bf16 %v199, %v199
    %v328 = vpack.c.bf16 %v200, %v200
    %v329 = vpack.c.bf16 %v201, %v201
    %v330 = vpack.c.bf16 %v202, %v202
    %v331 = vpack.c.bf16 %v203, %v203
    %v332 = vpack.c.bf16 %v204, %v204
    %v333 = vpack.c.bf16 %v205, %v205
    %v334 = vld [vmem:[#allocation6] sm:$0xff]
    %v335 = vld [vmem:[#allocation6 + $0x8] sm:$0xff]
    %v336 = vld [vmem:[#allocation6 + $0x10] sm:$0xff]
    %v337 = vld [vmem:[#allocation6 + $0x18] sm:$0xff]
    %v338 = vld [vmem:[#allocation6 + $0x20] sm:$0xff]
    %v339 = vld [vmem:[#allocation6 + $0x28] sm:$0xff]
    %v340 = vld [vmem:[#allocation6 + $0x30] sm:$0xff]
    %v341 = vld [vmem:[#allocation6 + $0x38] sm:$0xff]
    %v342 = vld [vmem:[#allocation6 + $0x40] sm:$0xff]
    %v343 = vld [vmem:[#allocation6 + $0x48] sm:$0xff]
    %v344 = vld [vmem:[#allocation6 + $0x50] sm:$0xff]
    %v345 = vld [vmem:[#allocation6 + $0x58] sm:$0xff]
    %v346 = vld [vmem:[#allocation6 + $0x60] sm:$0xff]
    %v347 = vld [vmem:[#allocation6 + $0x68] sm:$0xff]
    %v348 = vld [vmem:[#allocation6 + $0x70] sm:$0xff]
    %v349 = vld [vmem:[#allocation6 + $0x78] sm:$0xff]
    %v350 = vld [vmem:[#allocation6 + $0x80] sm:$0xff]
    %v351 = vld [vmem:[#allocation6 + $0x88] sm:$0xff]
    %v352 = vld [vmem:[#allocation6 + $0x90] sm:$0xff]
    %v353 = vld [vmem:[#allocation6 + $0x98] sm:$0xff]
    %v354 = vld [vmem:[#allocation6 + $0xa0] sm:$0xff]
    %v355 = vld [vmem:[#allocation6 + $0xa8] sm:$0xff]
    %v356 = vld [vmem:[#allocation6 + $0xb0] sm:$0xff]
    %v357 = vld [vmem:[#allocation6 + $0xb8] sm:$0xff]
    %v358 = vld [vmem:[#allocation6 + $0xc0] sm:$0xff]
    %v359 = vld [vmem:[#allocation6 + $0xc8] sm:$0xff]
    %v360 = vld [vmem:[#allocation6 + $0xd0] sm:$0xff]
    %v361 = vld [vmem:[#allocation6 + $0xd8] sm:$0xff]
    %v362 = vld [vmem:[#allocation6 + $0xe0] sm:$0xff]
    %v363 = vld [vmem:[#allocation6 + $0xe8] sm:$0xff]
    %v364 = vld [vmem:[#allocation6 + $0xf0] sm:$0xff]
    %v365 = vld [vmem:[#allocation6 + $0xf8] sm:$0xff]
    %v366 = vpack.c.bf16 %v212, %v212
    %v367 = vpack.c.bf16 %v219, %v219
    %v368 = vpack.c.bf16 %v226, %v226
    %v369 = vpack.c.bf16 %v233, %v233
    %v370 = vpack.c.bf16 %v240, %v240
    %v371 = vpack.c.bf16 %v247, %v247
    %v372 = vpack.c.bf16 %v254, %v254
    %v373 = vpack.c.bf16 %v261, %v261
    %v374 = vpack.c.bf16 %v268, %v268
    %v375 = vpack.c.bf16 %v275, %v275
    %v376 = vpack.c.bf16 %v282, %v282
    %v377 = vpack.c.bf16 %v289, %v289
    %v378 = vpack.c.bf16 %v296, %v296
    %v379 = vpack.c.bf16 %v303, %v303
    %v380 = vpack.c.bf16 %v310, %v310
    %v381 = vpack.c.bf16 %v317, %v317
    %s382 = scalar_lea.vmem [#allocation6], 256
    %v383 = vld [vmem:[%s382] sm:$0xff]
    %v384 = vld [vmem:[%s382 + $0x8] sm:$0xff]
    %v385 = vld [vmem:[%s382 + $0x10] sm:$0xff]
    %v386 = vld [vmem:[%s382 + $0x18] sm:$0xff]
    %v387 = vld [vmem:[%s382 + $0x20] sm:$0xff]
    %v388 = vld [vmem:[%s382 + $0x28] sm:$0xff]
    %v389 = vld [vmem:[%s382 + $0x30] sm:$0xff]
    %v390 = vld [vmem:[%s382 + $0x38] sm:$0xff]
    %v391 = vld [vmem:[%s382 + $0x40] sm:$0xff]
    %v392 = vld [vmem:[%s382 + $0x48] sm:$0xff]
    %v393 = vld [vmem:[%s382 + $0x50] sm:$0xff]
    %v394 = vld [vmem:[%s382 + $0x58] sm:$0xff]
    %v395 = vld [vmem:[%s382 + $0x60] sm:$0xff]
    %v396 = vld [vmem:[%s382 + $0x68] sm:$0xff]
    %v397 = vld [vmem:[%s382 + $0x70] sm:$0xff]
    %v398 = vld [vmem:[%s382 + $0x78] sm:$0xff]
    %v399 = vld [vmem:[%s382 + $0x80] sm:$0xff]
    %v400 = vld [vmem:[%s382 + $0x88] sm:$0xff]
    %v401 = vld [vmem:[%s382 + $0x90] sm:$0xff]
    %v402 = vld [vmem:[%s382 + $0x98] sm:$0xff]
    %v403 = vld [vmem:[%s382 + $0xa0] sm:$0xff]
    %v404 = vld [vmem:[%s382 + $0xa8] sm:$0xff]
    %v405 = vld [vmem:[%s382 + $0xb0] sm:$0xff]
    %v406 = vld [vmem:[%s382 + $0xb8] sm:$0xff]
    %v407 = vld [vmem:[%s382 + $0xc0] sm:$0xff]
    %v408 = vld [vmem:[%s382 + $0xc8] sm:$0xff]
    %v409 = vld [vmem:[%s382 + $0xd0] sm:$0xff]
    %v410 = vld [vmem:[%s382 + $0xd8] sm:$0xff]
    %v411 = vld [vmem:[%s382 + $0xe0] sm:$0xff]
    %v412 = vld [vmem:[%s382 + $0xe8] sm:$0xff]
    %v413 = vld [vmem:[%s382 + $0xf0] sm:$0xff]
    %v414 = vld [vmem:[%s382 + $0xf8] sm:$0xff]
    %v431 = vunpack.c.l.b16 %v366
    %v432 = vunpack.c.l.b16 %v367
    %v433 = vunpack.c.l.b16 %v368
    %v434 = vunpack.c.l.b16 %v369
    %v435 = vunpack.c.l.b16 %v370
    %v436 = vunpack.c.l.b16 %v371
    %v437 = vunpack.c.l.b16 %v372
    %v438 = vunpack.c.l.b16 %v373
    %v439 = vunpack.c.l.b16 %v374
    %v440 = vunpack.c.l.b16 %v375
    %v441 = vunpack.c.l.b16 %v376
    %v442 = vunpack.c.l.b16 %v377
    %v443 = vunpack.c.l.b16 %v378
    %v444 = vunpack.c.l.b16 %v379
    %v445 = vunpack.c.l.b16 %v380
    %v446 = vunpack.c.l.b16 %v381
    %vm447 = vcmask 1041409
    %v448 = vsel %vm447, %v433, %v431
    %vm449 = vcmask 1042434
    %v450 = vsel %vm449, %v435, %v448
    %vm451 = vcmask 1043459
    %v452 = vsel %vm451, %v437, %v450
    %vm453 = vcmask 1044484
    %v454 = vsel %vm453, %v439, %v452
    %vm455 = vcmask 1045509
    %v456 = vsel %vm455, %v441, %v454
    %vm457 = vcmask 1046534
    %v458 = vsel %vm457, %v443, %v456
    %vm459 = vcmask 1047559
    %v460 = vsel %vm459, %v445, %v458
    %v461 = vsel %vm447, %v434, %v432
    %v462 = vsel %vm449, %v436, %v461
    %v463 = vsel %vm451, %v438, %v462
    %v464 = vsel %vm453, %v440, %v463
    %v465 = vsel %vm455, %v442, %v464
    %v466 = vsel %vm457, %v444, %v465
    %v467 = vsel %vm459, %v446, %v466
    %v468 = vpack.c.b16 %v460, %v460
    %v469 = vpack.c.b16 %v467, %v467
    %v504 = vunpack.c.l.b16 %v383
    %v505 = vunpack.c.h.b16 %v383
    %v506 = vunpack.c.l.b16 %v384
    %v507 = vunpack.c.h.b16 %v384
    %v508 = vunpack.c.l.b16 %v385
    %v509 = vunpack.c.h.b16 %v385
    %v510 = vunpack.c.l.b16 %v386
    %v511 = vunpack.c.h.b16 %v386
    %v512 = vunpack.c.l.b16 %v387
    %v513 = vunpack.c.h.b16 %v387
    %v514 = vunpack.c.l.b16 %v388
    %v515 = vunpack.c.h.b16 %v388
    %v516 = vunpack.c.l.b16 %v389
    %v517 = vunpack.c.h.b16 %v389
    %v518 = vunpack.c.l.b16 %v390
    %v519 = vunpack.c.h.b16 %v390
    %v520 = vunpack.c.l.b16 %v391
    %v521 = vunpack.c.h.b16 %v391
    %v522 = vunpack.c.l.b16 %v392
    %v523 = vunpack.c.h.b16 %v392
    %v524 = vunpack.c.l.b16 %v393
    %v525 = vunpack.c.h.b16 %v393
    %v526 = vunpack.c.l.b16 %v394
    %v527 = vunpack.c.h.b16 %v394
    %v528 = vunpack.c.l.b16 %v395
    %v529 = vunpack.c.h.b16 %v395
    %v530 = vunpack.c.l.b16 %v396
    %v531 = vunpack.c.h.b16 %v396
    %v532 = vunpack.c.l.b16 %v397
    %v533 = vunpack.c.h.b16 %v397
    %v534 = vunpack.c.l.b16 %v398
    %v535 = vunpack.c.h.b16 %v398
    %v536 = vunpack.c.l.b16 %v399
    %v537 = vunpack.c.h.b16 %v399
    %v538 = vunpack.c.l.b16 %v400
    %v539 = vunpack.c.h.b16 %v400
    %v540 = vunpack.c.l.b16 %v401
    %v541 = vunpack.c.h.b16 %v401
    %v542 = vunpack.c.l.b16 %v402
    %v543 = vunpack.c.h.b16 %v402
    %v544 = vunpack.c.l.b16 %v403
    %v545 = vunpack.c.h.b16 %v403
    %v546 = vunpack.c.l.b16 %v404
    %v547 = vunpack.c.h.b16 %v404
    %v548 = vunpack.c.l.b16 %v405
    %v549 = vunpack.c.h.b16 %v405
    %v550 = vunpack.c.l.b16 %v406
    %v551 = vunpack.c.h.b16 %v406
    %v552 = vunpack.c.l.b16 %v407
    %v553 = vunpack.c.h.b16 %v407
    %v554 = vunpack.c.l.b16 %v408
    %v555 = vunpack.c.h.b16 %v408
    %v556 = vunpack.c.l.b16 %v409
    %v557 = vunpack.c.h.b16 %v409
    %v558 = vunpack.c.l.b16 %v410
    %v559 = vunpack.c.h.b16 %v410
    %v560 = vunpack.c.l.b16 %v411
    %v561 = vunpack.c.h.b16 %v411
    %v562 = vunpack.c.l.b16 %v412
    %v563 = vunpack.c.h.b16 %v412
    %v564 = vunpack.c.l.b16 %v413
    %v565 = vunpack.c.h.b16 %v413
    %v566 = vunpack.c.l.b16 %v414
    %v567 = vunpack.c.h.b16 %v414
    %v568 = vpack.c.b16 %v506, %v504
    %v569 = vpack.c.b16 %v507, %v505
    %v570 = vpack.c.b16 %v510, %v508
    %v571 = vpack.c.b16 %v511, %v509
    %v572 = vpack.c.b16 %v514, %v512
    %v573 = vpack.c.b16 %v515, %v513
    %v574 = vpack.c.b16 %v518, %v516
    %v575 = vpack.c.b16 %v519, %v517
    %v576 = vpack.c.b16 %v522, %v520
    %v577 = vpack.c.b16 %v523, %v521
    %v578 = vpack.c.b16 %v526, %v524
    %v579 = vpack.c.b16 %v527, %v525
    %v580 = vpack.c.b16 %v530, %v528
    %v581 = vpack.c.b16 %v531, %v529
    %v582 = vpack.c.b16 %v534, %v532
    %v583 = vpack.c.b16 %v535, %v533
    %v584 = vpack.c.b16 %v538, %v536
    %v585 = vpack.c.b16 %v539, %v537
    %v586 = vpack.c.b16 %v542, %v540
    %v587 = vpack.c.b16 %v543, %v541
    %v588 = vpack.c.b16 %v546, %v544
    %v589 = vpack.c.b16 %v547, %v545
    %v590 = vpack.c.b16 %v550, %v548
    %v591 = vpack.c.b16 %v551, %v549
    %v592 = vpack.c.b16 %v554, %v552
    %v593 = vpack.c.b16 %v555, %v553
    %v594 = vpack.c.b16 %v558, %v556
    %v595 = vpack.c.b16 %v559, %v557
    %v596 = vpack.c.b16 %v562, %v560
    %v597 = vpack.c.b16 %v563, %v561
    %v598 = vpack.c.b16 %v566, %v564
    %v599 = vpack.c.b16 %v567, %v565
    %632 = vmatprep.subr.bf16.mxu0 %v569
    %633 = vmatpush1.bf16.msra.mxu0 %v568
    %634 = vmatprep.subr.bf16.mxu0 %v571
    %635 = vmatpush1.bf16.msra.mxu0 %v570
    %636 = vmatprep.subr.bf16.mxu0 %v573
    %637 = vmatpush1.bf16.msra.mxu0 %v572
    %638 = vmatprep.subr.bf16.mxu0 %v575
    %639 = vmatpush1.bf16.msra.mxu0 %v574
    %640 = vmatprep.subr.bf16.mxu0 %v577
    %641 = vmatpush1.bf16.msra.mxu0 %v576
    %642 = vmatprep.subr.bf16.mxu0 %v579
    %643 = vmatpush1.bf16.msra.mxu0 %v578
    %644 = vmatprep.subr.bf16.mxu0 %v581
    %645 = vmatpush1.bf16.msra.mxu0 %v580
    %646 = vmatprep.subr.bf16.mxu0 %v583
    %647 = vmatpush1.bf16.msra.mxu0 %v582
    %648 = vmatprep.subr.bf16.mxu0 %v585
    %649 = vmatpush1.bf16.msra.mxu0 %v584
    %650 = vmatprep.subr.bf16.mxu0 %v587
    %651 = vmatpush1.bf16.msra.mxu0 %v586
    %652 = vmatprep.subr.bf16.mxu0 %v589
    %653 = vmatpush1.bf16.msra.mxu0 %v588
    %654 = vmatprep.subr.bf16.mxu0 %v591
    %655 = vmatpush1.bf16.msra.mxu0 %v590
    %656 = vmatprep.subr.bf16.mxu0 %v593
    %657 = vmatpush1.bf16.msra.mxu0 %v592
    %658 = vmatprep.subr.bf16.mxu0 %v595
    %659 = vmatpush1.bf16.msra.mxu0 %v594
    %660 = vmatprep.subr.bf16.mxu0 %v597
    %661 = vmatpush1.bf16.msra.mxu0 %v596
    %662 = vmatprep.subr.bf16.mxu0 %v599
    %663 = vmatpush1.bf16.msra.mxu0 %v598
    %664 = vmatprep.mubr.bf16.mxu0 %v469
    %665 = vmatmul.mubr.bf16.gmra.mrb[0].mxu0 %v468
    %v666 = vpop.f32.mrb[0].mxu0
    %v667 = vadd.f32 0.0, %v666
    %v668 = vpop.f32.mrb[0].mxu0
    %v669 = vadd.f32 0.0, %v668
    %v670 = vpop.f32.mrb[0].mxu0
    %v671 = vpop.f32.mrb[0].mxu0
    %672 = vdwg.mxu0
    %v689 = vunpack.c.l.b16 %v318
    %v690 = vunpack.c.l.b16 %v319
    %v691 = vunpack.c.l.b16 %v320
    %v692 = vunpack.c.l.b16 %v321
    %v693 = vunpack.c.l.b16 %v322
    %v694 = vunpack.c.l.b16 %v323
    %v695 = vunpack.c.l.b16 %v324
    %v696 = vunpack.c.l.b16 %v325
    %v697 = vunpack.c.l.b16 %v326
    %v698 = vunpack.c.l.b16 %v327
    %v699 = vunpack.c.l.b16 %v328
    %v700 = vunpack.c.l.b16 %v329
    %v701 = vunpack.c.l.b16 %v330
    %v702 = vunpack.c.l.b16 %v331
    %v703 = vunpack.c.l.b16 %v332
    %v704 = vunpack.c.l.b16 %v333
    %v705 = vsel %vm447, %v691, %v689
    %v706 = vsel %vm449, %v693, %v705
    %v707 = vsel %vm451, %v695, %v706
    %v708 = vsel %vm453, %v697, %v707
    %v709 = vsel %vm455, %v699, %v708
    %v710 = vsel %vm457, %v701, %v709
    %v711 = vsel %vm459, %v703, %v710
    %v712 = vsel %vm447, %v692, %v690
    %v713 = vsel %vm449, %v694, %v712
    %v714 = vsel %vm451, %v696, %v713
    %v715 = vsel %vm453, %v698, %v714
    %v716 = vsel %vm455, %v700, %v715
    %v717 = vsel %vm457, %v702, %v716
    %v718 = vsel %vm459, %v704, %v717
    %v719 = vpack.c.b16 %v711, %v711
    %v720 = vpack.c.b16 %v718, %v718
    %v755 = vunpack.c.l.b16 %v334
    %v756 = vunpack.c.h.b16 %v334
    %v757 = vunpack.c.l.b16 %v335
    %v758 = vunpack.c.h.b16 %v335
    %v759 = vunpack.c.l.b16 %v336
    %v760 = vunpack.c.h.b16 %v336
    %v761 = vunpack.c.l.b16 %v337
    %v762 = vunpack.c.h.b16 %v337
    %v763 = vunpack.c.l.b16 %v338
    %v764 = vunpack.c.h.b16 %v338
    %v765 = vunpack.c.l.b16 %v339
    %v766 = vunpack.c.h.b16 %v339
    %v767 = vunpack.c.l.b16 %v340
    %v768 = vunpack.c.h.b16 %v340
    %v769 = vunpack.c.l.b16 %v341
    %v770 = vunpack.c.h.b16 %v341
    %v771 = vunpack.c.l.b16 %v342
    %v772 = vunpack.c.h.b16 %v342
    %v773 = vunpack.c.l.b16 %v343
    %v774 = vunpack.c.h.b16 %v343
    %v775 = vunpack.c.l.b16 %v344
    %v776 = vunpack.c.h.b16 %v344
    %v777 = vunpack.c.l.b16 %v345
    %v778 = vunpack.c.h.b16 %v345
    %v779 = vunpack.c.l.b16 %v346
    %v780 = vunpack.c.h.b16 %v346
    %v781 = vunpack.c.l.b16 %v347
    %v782 = vunpack.c.h.b16 %v347
    %v783 = vunpack.c.l.b16 %v348
    %v784 = vunpack.c.h.b16 %v348
    %v785 = vunpack.c.l.b16 %v349
    %v786 = vunpack.c.h.b16 %v349
    %v787 = vunpack.c.l.b16 %v350
    %v788 = vunpack.c.h.b16 %v350
    %v789 = vunpack.c.l.b16 %v351
    %v790 = vunpack.c.h.b16 %v351
    %v791 = vunpack.c.l.b16 %v352
    %v792 = vunpack.c.h.b16 %v352
    %v793 = vunpack.c.l.b16 %v353
    %v794 = vunpack.c.h.b16 %v353
    %v795 = vunpack.c.l.b16 %v354
    %v796 = vunpack.c.h.b16 %v354
    %v797 = vunpack.c.l.b16 %v355
    %v798 = vunpack.c.h.b16 %v355
    %v799 = vunpack.c.l.b16 %v356
    %v800 = vunpack.c.h.b16 %v356
    %v801 = vunpack.c.l.b16 %v357
    %v802 = vunpack.c.h.b16 %v357
    %v803 = vunpack.c.l.b16 %v358
    %v804 = vunpack.c.h.b16 %v358
    %v805 = vunpack.c.l.b16 %v359
    %v806 = vunpack.c.h.b16 %v359
    %v807 = vunpack.c.l.b16 %v360
    %v808 = vunpack.c.h.b16 %v360
    %v809 = vunpack.c.l.b16 %v361
    %v810 = vunpack.c.h.b16 %v361
    %v811 = vunpack.c.l.b16 %v362
    %v812 = vunpack.c.h.b16 %v362
    %v813 = vunpack.c.l.b16 %v363
    %v814 = vunpack.c.h.b16 %v363
    %v815 = vunpack.c.l.b16 %v364
    %v816 = vunpack.c.h.b16 %v364
    %v817 = vunpack.c.l.b16 %v365
    %v818 = vunpack.c.h.b16 %v365
    %v819 = vpack.c.b16 %v757, %v755
    %v820 = vpack.c.b16 %v758, %v756
    %v821 = vpack.c.b16 %v761, %v759
    %v822 = vpack.c.b16 %v762, %v760
    %v823 = vpack.c.b16 %v765, %v763
    %v824 = vpack.c.b16 %v766, %v764
    %v825 = vpack.c.b16 %v769, %v767
    %v826 = vpack.c.b16 %v770, %v768
    %v827 = vpack.c.b16 %v773, %v771
    %v828 = vpack.c.b16 %v774, %v772
    %v829 = vpack.c.b16 %v777, %v775
    %v830 = vpack.c.b16 %v778, %v776
    %v831 = vpack.c.b16 %v781, %v779
    %v832 = vpack.c.b16 %v782, %v780
    %v833 = vpack.c.b16 %v785, %v783
    %v834 = vpack.c.b16 %v786, %v784
    %v835 = vpack.c.b16 %v789, %v787
    %v836 = vpack.c.b16 %v790, %v788
    %v837 = vpack.c.b16 %v793, %v791
    %v838 = vpack.c.b16 %v794, %v792
    %v839 = vpack.c.b16 %v797, %v795
    %v840 = vpack.c.b16 %v798, %v796
    %v841 = vpack.c.b16 %v801, %v799
    %v842 = vpack.c.b16 %v802, %v800
    %v843 = vpack.c.b16 %v805, %v803
    %v844 = vpack.c.b16 %v806, %v804
    %v845 = vpack.c.b16 %v809, %v807
    %v846 = vpack.c.b16 %v810, %v808
    %v847 = vpack.c.b16 %v813, %v811
    %v848 = vpack.c.b16 %v814, %v812
    %v849 = vpack.c.b16 %v817, %v815
    %v850 = vpack.c.b16 %v818, %v816
    %883 = vmatprep.subr.bf16.mxu0 %v820
    %884 = vmatpush1.bf16.msra.mxu0 %v819
    %885 = vmatprep.subr.bf16.mxu0 %v822
    %886 = vmatpush1.bf16.msra.mxu0 %v821
    %887 = vmatprep.subr.bf16.mxu0 %v824
    %888 = vmatpush1.bf16.msra.mxu0 %v823
    %889 = vmatprep.subr.bf16.mxu0 %v826
    %890 = vmatpush1.bf16.msra.mxu0 %v825
    %891 = vmatprep.subr.bf16.mxu0 %v828
    %892 = vmatpush1.bf16.msra.mxu0 %v827
    %893 = vmatprep.subr.bf16.mxu0 %v830
    %894 = vmatpush1.bf16.msra.mxu0 %v829
    %895 = vmatprep.subr.bf16.mxu0 %v832
    %896 = vmatpush1.bf16.msra.mxu0 %v831
    %897 = vmatprep.subr.bf16.mxu0 %v834
    %898 = vmatpush1.bf16.msra.mxu0 %v833
    %899 = vmatprep.subr.bf16.mxu0 %v836
    %900 = vmatpush1.bf16.msra.mxu0 %v835
    %901 = vmatprep.subr.bf16.mxu0 %v838
    %902 = vmatpush1.bf16.msra.mxu0 %v837
    %903 = vmatprep.subr.bf16.mxu0 %v840
    %904 = vmatpush1.bf16.msra.mxu0 %v839
    %905 = vmatprep.subr.bf16.mxu0 %v842
    %906 = vmatpush1.bf16.msra.mxu0 %v841
    %907 = vmatprep.subr.bf16.mxu0 %v844
    %908 = vmatpush1.bf16.msra.mxu0 %v843
    %909 = vmatprep.subr.bf16.mxu0 %v846
    %910 = vmatpush1.bf16.msra.mxu0 %v845
    %911 = vmatprep.subr.bf16.mxu0 %v848
    %912 = vmatpush1.bf16.msra.mxu0 %v847
    %913 = vmatprep.subr.bf16.mxu0 %v850
    %914 = vmatpush1.bf16.msra.mxu0 %v849
    %915 = vmatprep.mubr.bf16.mxu0 %v720
    %916 = vmatmul.mubr.bf16.gmra.mrb[0].mxu0 %v719
    %v917 = vpop.f32.mrb[0].mxu0
    %v918 = vadd.f32 %v667, %v917
    %v919 = vpop.f32.mrb[0].mxu0
    %v920 = vadd.f32 %v669, %v919
    %v921 = vpop.f32.mrb[0].mxu0
    %v922 = vpop.f32.mrb[0].mxu0
    %923 = vdwg.mxu0
    %s924 = sld [smem:[#allocation2]]
    %v925 = vstv %s924
    %v926 = vadd.f32 %v918, %v925
    %v927 = vadd.f32 %v920, %v925
    %v928 = vxor.u32 %v926, 2147483648
    %v929 = vxor.u32 %v927, 2147483648
    %v930 = vmul.f32 %v928, 1.442695
    %v931 = vpow.pop %v930
    %v932 = vmul.f32 %v929, 1.442695
    %v933 = vpow.pop %v932
    %v934 = vadd.f32 %v931, 1.0
    %v935 = vadd.f32 %v933, 1.0
    %v936 = vrcp.pop %v934
    %v937 = vmul.f32 1.0, %v936
    %v938 = vrcp.pop %v935
    %v939 = vmul.f32 1.0, %v938
    %940 = vst [vmem:[#allocation8] sm:$0xff] %v937
    %941 = vst [vmem:[#allocation8 + $0x8] sm:$0xff] %v939
    // Predicated region
    $region22: #{tpu_custom_call.1} parent=1 // pred_check
      _
    $region23: #{tpu_custom_call.1} parent=1 // pred_check_branch
      %943 = sbr.rel (0) target = $region25
    $region24: #{tpu_custom_call.1} parent=1 // pred_region
      %s945 = ssub.s32 256, 256
      %946 = vsyncadd [#allocation5], %s945
      %s948 = sshll.u32 [#allocation8], 4
      %s949 = int_to_ptr.vmem [resolvable:$true] %s948
      %951 = dma.vmem_to_hbm [thread:$0]  %s949, 256, %s3, [#allocation5]
    $region25: #{tpu_custom_call.1} parent=1 // pred_fallthru
      _
    // Predicated region
    $region26: #{tpu_custom_call.1} parent=1 // pred_check
      _
    $region27: #{tpu_custom_call.1} parent=1 // pred_check_branch
      %953 = sbr.rel (0) target = $region29
    $region28: #{tpu_custom_call.1} parent=1 // pred_region
      %954 = dma.done [#allocation5], 256
    $region29: #{tpu_custom_call.1} parent=1 // pred_fallthru
      _
    %955 = vsyncpa [#allocation4], 1
    %956 = vsyncpa [#allocation7], 1
    %957 = vsyncpa [#allocation5], 1

</llo_original>
